<compile_context>
chip_gen: v5e
topology: v5e:2x2
jax: 0.10.0
libtpu: 0.0.40
codegen_flags: <defaults>
</compile_context>

<pallas_src>
import functools

import jax
import jax.numpy as jnp
from jax.experimental import pallas as pl
from jax.experimental.pallas import tpu as pltpu


def _lstm_mlp_kernel(x_ref,        # (T*B, I)   time-major, batch-padded, matmul dtype
                     wih0_ref,     # (I, 4H)
                     whh0_ref,     # (H, 4H)
                     b0_ref,       # (1, 4H)    f32, b_ih_l0 + b_hh_l0
                     w1cat_ref,    # (2H, 4H)   concat([W_ih_l1^T, W_hh_l1^T], axis=0)
                     b1_ref,       # (1, 4H)    f32, b_ih_l1 + b_hh_l1
                     wlin_ref,     # (H, O_pad)
                     blin_ref,     # (1, O_pad) f32
                     out_ref,      # (B, O_pad) f32
                     *, seq_len, batch):
    T, B = seq_len, batch
    H = whh0_ref.shape[0]
    cdt = whh0_ref.dtype                      # MXU operand dtype (bf16 fast path or f32)

    whh0 = whh0_ref[...]
    w1cat = w1cat_ref[...]
    b0 = b0_ref[...]
    b1 = b1_ref[...]

    # ---- hoisted layer-0 input projection: one MXU pass over all T*B rows ----
    xg_all = jnp.dot(x_ref[...], wih0_ref[...],
                     preferred_element_type=jnp.float32) + b0        # (T*B, 4H) f32

    def gates_to_hc(gates, c):
        # 2 full-vreg EUP pushes (sigmoid + tanh over all 4 gates at once)
        # instead of 4 sigmoid + 1 tanh on quarter-vreg slices.
        sig = jax.nn.sigmoid(gates)
        tg = jnp.tanh(gates)
        i = sig[:, 0 * H:1 * H]
        f = sig[:, 1 * H:2 * H]
        g = tg[:, 2 * H:3 * H]
        o = sig[:, 3 * H:4 * H]
        c_new = f * c + i * g                 # elementwise state kept in f32 (v5e-safe)
        h_new = o * jnp.tanh(c_new)
        return h_new, c_new

    zero = jnp.zeros((B, H), jnp.float32)
    h1, c1, h2, c2 = zero, zero, zero, zero

    # Fully unrolled recurrence (T is small & static): all slice offsets are static
    # and the scheduler can overlap work across timesteps.
    for t in range(T):
        # layer 0: x-part precomputed; only one recurrent matmul on the critical path.
        g0 = xg_all[t * B:(t + 1) * B, :] + jnp.dot(
            h1.astype(cdt), whh0, preferred_element_type=jnp.float32)
        h1, c1 = gates_to_hc(g0, c1)

        # layer 1: single fused matmul over concat([x(=h1), h_prev]).
        hcat = jnp.concatenate([h1, h2], axis=-1).astype(cdt)        # (B, 2H)
        g1 = jnp.dot(hcat, w1cat, preferred_element_type=jnp.float32) + b1
        h2, c2 = gates_to_hc(g1, c2)

    # dropout(p=0.1) in eval mode == identity
    y = jnp.dot(h2.astype(cdt), wlin_ref[...],
                preferred_element_type=jnp.float32) + blin_ref[...]
    out_ref[...] = jnp.maximum(y, 0.0)        # lane-dense (B_pad, O_pad) unmasked store


def _round_up(n, m):
    return ((n + m - 1) // m) * m


@functools.partial(jax.jit, static_argnames=("n_steps", "output_sz", "matmul_dtype"))
def air_model_forward(x, params, *, n_steps, output_sz, matmul_dtype=jnp.bfloat16):
    """x: (B, T, input_sz) float32, batch_first (PyTorch convention)."""
    B, T, I = x.shape
    H = params["whh_l0"].shape[1]
    O = params["w_lin"].shape[0]                    # output_sz * n_steps

    B_pad = _round_up(max(B, 8), 8)                 # fill all 8 sublanes / MXU rows
    O_pad = _round_up(max(O, 128), 128)             # lane-dense output tile

    # Time-major, batch-padded, flattened to (T*B_pad, I) for the hoisted layer-0
    # projection.  (Single cheap XLA transpose; fold into a time-chunked BlockSpec
    # index_map if/when a T grid is added for long sequences.)
    x_tm = jnp.transpose(x, (1, 0, 2)).astype(jnp.float32)            # (T, B, I)
    x_tm = jnp.pad(x_tm, ((0, 0), (0, B_pad - B), (0, 0)))
    x2d = x_tm.reshape(T * B_pad, I).astype(matmul_dtype)

    wih0 = params["wih_l0"].T.astype(matmul_dtype)                    # (I, 4H)
    whh0 = params["whh_l0"].T.astype(matmul_dtype)                    # (H, 4H)
    b0 = (params["bih_l0"] + params["bhh_l0"])[None, :]               # (1, 4H) f32
    w1cat = jnp.concatenate([params["wih_l1"].T, params["whh_l1"].T],
                            axis=0).astype(matmul_dtype)              # (2H, 4H)
    b1 = (params["bih_l1"] + params["bhh_l1"])[None, :]               # (1, 4H) f32
    wlin = jnp.pad(params["w_lin"].T,
                   ((0, 0), (0, O_pad - O))).astype(matmul_dtype)     # (H, O_pad)
    blin = jnp.pad(params["b_lin"], (0, O_pad - O))[None, :]          # (1, O_pad) f32

    kernel = functools.partial(_lstm_mlp_kernel, seq_len=T, batch=B_pad)
    vmem = pl.BlockSpec(memory_space=pltpu.MemorySpace.VMEM)
    out = pl.pallas_call(
        kernel,
        out_shape=jax.ShapeDtypeStruct((B_pad, O_pad), jnp.float32),
        in_specs=[vmem] * 8,
        out_specs=vmem,
    )(x2d, wih0, whh0, b0, w1cat, b1, wlin, blin)

    return out[:B, :O].reshape(-1, n_steps, output_sz)


def init_params(key, input_sz, hidden_sz, output_sz, n_steps):
    """PyTorch-style uniform(-1/sqrt(H), 1/sqrt(H)) init, deterministic."""
    H = hidden_sz
    k = 1.0 / jnp.sqrt(jnp.float32(H))
    keys = jax.random.split(key, 10)

    def u(kk, shape):
        return jax.random.uniform(kk, shape, jnp.float32, -k, k)

    return {
        "wih_l0": u(keys[0], (4 * H, input_sz)),
        "whh_l0": u(keys[1], (4 * H, H)),
        "bih_l0": u(keys[2], (4 * H,)),
        "bhh_l0": u(keys[3], (4 * H,)),
        "wih_l1": u(keys[4], (4 * H, H)),
        "whh_l1": u(keys[5], (4 * H, H)),
        "bih_l1": u(keys[6], (4 * H,)),
        "bhh_l1": u(keys[7], (4 * H,)),
        "w_lin": u(keys[8], (output_sz * n_steps, H)),
        "b_lin": u(keys[9], (output_sz * n_steps,)),
    }


def _reference_forward(x, params, n_steps, output_sz):
    """Pure-JAX f32 reference matching PyTorch nn.LSTM / Linear semantics."""
    B, T, _ = x.shape
    H = params["whh_l0"].shape[1]

    def cell(x_t, h, c, wih, whh, bih, bhh):
        g = x_t @ wih.T + bih + h @ whh.T + bhh
        i = jax.nn.sigmoid(g[:, 0 * H:1 * H])
        f = jax.nn.sigmoid(g[:, 1 * H:2 * H])
        gg = jnp.tanh(g[:, 2 * H:3 * H])
        o = jax.nn.sigmoid(g[:, 3 * H:4 * H])
        c = f * c + i * gg
        h = o * jnp.tanh(c)
        return h, c

    h1 = c1 = h2 = c2 = jnp.zeros((B, H), jnp.float32)
    for t in range(T):
        h1, c1 = cell(x[:, t, :], h1, c1, params["wih_l0"], params["whh_l0"],
                      params["bih_l0"], params["bhh_l0"])
        h2, c2 = cell(h1, h2, c2, params["wih_l1"], params["whh_l1"],
                      params["bih_l1"], params["bhh_l1"])
    y = jnp.maximum(h2 @ params["w_lin"].T + params["b_lin"], 0.0)
    return y.reshape(-1, n_steps, output_sz)


if __name__ == "__main__":
    # Small shapes consistent with the module's forward.
    batch, seq_len = 2, 8
    input_sz, hidden_sz, output_sz, n_steps = 4, 32, 4, 1

    key = jax.random.PRNGKey(0)
    k_x, k_p = jax.random.split(key)
    x = jax.random.normal(k_x, (batch, seq_len, input_sz), jnp.float32)
    params = init_params(k_p, input_sz, hidden_sz, output_sz, n_steps)

    ref = _reference_forward(x, params, n_steps, output_sz)

    # f32-operand variant: near bit-faithful check vs the pure-JAX reference.
    out_f32 = air_model_forward(x, params, n_steps=n_steps, output_sz=output_sz,
                                matmul_dtype=jnp.float32)
    out_f32 = jax.block_until_ready(out_f32)
    assert out_f32.shape == (batch, n_steps, output_sz)
    assert jnp.allclose(out_f32, ref, rtol=1e-4, atol=1e-4), "f32 kernel mismatch vs reference"

    # bf16 MXU-operand fast path (default): f32 accumulation, looser tolerance.
    out_bf16 = air_model_forward(x, params, n_steps=n_steps, output_sz=output_sz,
                                 matmul_dtype=jnp.bfloat16)
    out_bf16 = jax.block_until_ready(out_bf16)
    assert out_bf16.shape == (batch, n_steps, output_sz)
    assert jnp.allclose(out_bf16, ref, rtol=2e-2, atol=2e-2), "bf16 kernel mismatch vs reference"

    print("KERNEL_OK")
</pallas_src>

<mosaic_0001>
module attributes {stable_mosaic.version = 11 : i64} {
  func.func @_lstm_mlp_kernel(%arg0: memref<64x4xf32, #tpu.memory_space<vmem>>, %arg1: memref<4x128xf32, #tpu.memory_space<vmem>>, %arg2: memref<32x128xf32, #tpu.memory_space<vmem>>, %arg3: memref<1x128xf32, #tpu.memory_space<vmem>>, %arg4: memref<64x128xf32, #tpu.memory_space<vmem>>, %arg5: memref<1x128xf32, #tpu.memory_space<vmem>>, %arg6: memref<32x128xf32, #tpu.memory_space<vmem>>, %arg7: memref<1x128xf32, #tpu.memory_space<vmem>>, %arg8: memref<8x128xf32, #tpu.memory_space<vmem>>) attributes {dimension_semantics = [], scalar_prefetch = 0 : i64, scratch_operands = 0 : i64, tpu.core_type = #tpu.core_type<tc>} {
    %c0 = arith.constant 0 : index
    %c0_0 = arith.constant 0 : index
    %0 = vector.load %arg2[%c0, %c0_0] : memref<32x128xf32, #tpu.memory_space<vmem>>, vector<32x128xf32>
    %c0_1 = arith.constant 0 : index
    %c0_2 = arith.constant 0 : index
    %1 = vector.load %arg4[%c0_1, %c0_2] : memref<64x128xf32, #tpu.memory_space<vmem>>, vector<64x128xf32>
    %c0_3 = arith.constant 0 : index
    %c0_4 = arith.constant 0 : index
    %2 = vector.load %arg3[%c0_3, %c0_4] : memref<1x128xf32, #tpu.memory_space<vmem>>, vector<1x128xf32>
    %c0_5 = arith.constant 0 : index
    %c0_6 = arith.constant 0 : index
    %3 = vector.load %arg5[%c0_5, %c0_6] : memref<1x128xf32, #tpu.memory_space<vmem>>, vector<1x128xf32>
    %c0_7 = arith.constant 0 : index
    %c0_8 = arith.constant 0 : index
    %4 = vector.load %arg0[%c0_7, %c0_8] : memref<64x4xf32, #tpu.memory_space<vmem>>, vector<64x4xf32>
    %c0_9 = arith.constant 0 : index
    %c0_10 = arith.constant 0 : index
    %5 = vector.load %arg1[%c0_9, %c0_10] : memref<4x128xf32, #tpu.memory_space<vmem>>, vector<4x128xf32>
    %cst = arith.constant dense<0.000000e+00> : vector<64x128xf32>
    %6 = tpu.matmul %4, %5, %cst {dimension_numbers = #tpu.dot_dimension_numbers<[1], [0], [0], [1], [0, 0, 1, 1], [], []>} : vector<64x4xf32>, vector<4x128xf32>, vector<64x128xf32> -> vector<64x128xf32>
    %7 = vector.broadcast %2 : vector<1x128xf32> to vector<64x128xf32>
    %8 = arith.addf %6, %7 : vector<64x128xf32>
    %cst_11 = arith.constant 0.000000e+00 : f32
    %9 = vector.broadcast %cst_11 : f32 to vector<8x32xf32>
    %10 = vector.extract_strided_slice %8 {offsets = [0, 0], sizes = [8, 128], strides = [1, 1]} : vector<64x128xf32> to vector<8x128xf32>
    %cst_12 = arith.constant dense<0.000000e+00> : vector<8x128xf32>
    %11 = tpu.matmul %9, %0, %cst_12 {dimension_numbers = #tpu.dot_dimension_numbers<[1], [0], [0], [1], [0, 0, 1, 1], [], []>} : vector<8x32xf32>, vector<32x128xf32>, vector<8x128xf32> -> vector<8x128xf32>
    %12 = arith.addf %10, %11 : vector<8x128xf32>
    %13 = arith.negf %12 : vector<8x128xf32>
    %14 = math.exp %13 : vector<8x128xf32>
    %cst_13 = arith.constant 1.000000e+00 : f32
    %15 = vector.broadcast %cst_13 : f32 to vector<8x128xf32>
    %16 = arith.addf %15, %14 : vector<8x128xf32>
    %17 = arith.divf %15, %16 : vector<8x128xf32>
    %18 = math.tanh %12 : vector<8x128xf32>
    %19 = vector.extract_strided_slice %17 {offsets = [0, 0], sizes = [8, 32], strides = [1, 1]} : vector<8x128xf32> to vector<8x32xf32>
    %20 = vector.extract_strided_slice %17 {offsets = [0, 32], sizes = [8, 32], strides = [1, 1]} : vector<8x128xf32> to vector<8x32xf32>
    %21 = vector.extract_strided_slice %18 {offsets = [0, 64], sizes = [8, 32], strides = [1, 1]} : vector<8x128xf32> to vector<8x32xf32>
    %22 = vector.extract_strided_slice %17 {offsets = [0, 96], sizes = [8, 32], strides = [1, 1]} : vector<8x128xf32> to vector<8x32xf32>
    %23 = arith.mulf %20, %9 : vector<8x32xf32>
    %24 = arith.mulf %19, %21 : vector<8x32xf32>
    %25 = arith.addf %23, %24 : vector<8x32xf32>
    %26 = math.tanh %25 : vector<8x32xf32>
    %27 = arith.mulf %22, %26 : vector<8x32xf32>
    %28 = tpu.concatenate %27, %9 in 1 : vector<8x32xf32>, vector<8x32xf32> -> vector<8x64xf32>
    %cst_14 = arith.constant dense<0.000000e+00> : vector<8x128xf32>
    %29 = tpu.matmul %28, %1, %cst_14 {dimension_numbers = #tpu.dot_dimension_numbers<[1], [0], [0], [1], [0, 0, 1, 1], [], []>} : vector<8x64xf32>, vector<64x128xf32>, vector<8x128xf32> -> vector<8x128xf32>
    %30 = vector.broadcast %3 : vector<1x128xf32> to vector<8x128xf32>
    %31 = arith.addf %29, %30 : vector<8x128xf32>
    %32 = arith.negf %31 : vector<8x128xf32>
    %33 = math.exp %32 : vector<8x128xf32>
    %cst_15 = arith.constant 1.000000e+00 : f32
    %34 = vector.broadcast %cst_15 : f32 to vector<8x128xf32>
    %35 = arith.addf %34, %33 : vector<8x128xf32>
    %36 = arith.divf %34, %35 : vector<8x128xf32>
    %37 = math.tanh %31 : vector<8x128xf32>
    %38 = vector.extract_strided_slice %36 {offsets = [0, 0], sizes = [8, 32], strides = [1, 1]} : vector<8x128xf32> to vector<8x32xf32>
    %39 = vector.extract_strided_slice %36 {offsets = [0, 32], sizes = [8, 32], strides = [1, 1]} : vector<8x128xf32> to vector<8x32xf32>
    %40 = vector.extract_strided_slice %37 {offsets = [0, 64], sizes = [8, 32], strides = [1, 1]} : vector<8x128xf32> to vector<8x32xf32>
    %41 = vector.extract_strided_slice %36 {offsets = [0, 96], sizes = [8, 32], strides = [1, 1]} : vector<8x128xf32> to vector<8x32xf32>
    %42 = arith.mulf %39, %9 : vector<8x32xf32>
    %43 = arith.mulf %38, %40 : vector<8x32xf32>
    %44 = arith.addf %42, %43 : vector<8x32xf32>
    %45 = math.tanh %44 : vector<8x32xf32>
    %46 = arith.mulf %41, %45 : vector<8x32xf32>
    %47 = vector.extract_strided_slice %8 {offsets = [8, 0], sizes = [8, 128], strides = [1, 1]} : vector<64x128xf32> to vector<8x128xf32>
    %cst_16 = arith.constant dense<0.000000e+00> : vector<8x128xf32>
    %48 = tpu.matmul %27, %0, %cst_16 {dimension_numbers = #tpu.dot_dimension_numbers<[1], [0], [0], [1], [0, 0, 1, 1], [], []>} : vector<8x32xf32>, vector<32x128xf32>, vector<8x128xf32> -> vector<8x128xf32>
    %49 = arith.addf %47, %48 : vector<8x128xf32>
    %50 = arith.negf %49 : vector<8x128xf32>
    %51 = math.exp %50 : vector<8x128xf32>
    %cst_17 = arith.constant 1.000000e+00 : f32
    %52 = vector.broadcast %cst_17 : f32 to vector<8x128xf32>
    %53 = arith.addf %52, %51 : vector<8x128xf32>
    %54 = arith.divf %52, %53 : vector<8x128xf32>
    %55 = math.tanh %49 : vector<8x128xf32>
    %56 = vector.extract_strided_slice %54 {offsets = [0, 0], sizes = [8, 32], strides = [1, 1]} : vector<8x128xf32> to vector<8x32xf32>
    %57 = vector.extract_strided_slice %54 {offsets = [0, 32], sizes = [8, 32], strides = [1, 1]} : vector<8x128xf32> to vector<8x32xf32>
    %58 = vector.extract_strided_slice %55 {offsets = [0, 64], sizes = [8, 32], strides = [1, 1]} : vector<8x128xf32> to vector<8x32xf32>
    %59 = vector.extract_strided_slice %54 {offsets = [0, 96], sizes = [8, 32], strides = [1, 1]} : vector<8x128xf32> to vector<8x32xf32>
    %60 = arith.mulf %57, %25 : vector<8x32xf32>
    %61 = arith.mulf %56, %58 : vector<8x32xf32>
    %62 = arith.addf %60, %61 : vector<8x32xf32>
    %63 = math.tanh %62 : vector<8x32xf32>
    %64 = arith.mulf %59, %63 : vector<8x32xf32>
    %65 = tpu.concatenate %64, %46 in 1 : vector<8x32xf32>, vector<8x32xf32> -> vector<8x64xf32>
    %cst_18 = arith.constant dense<0.000000e+00> : vector<8x128xf32>
    %66 = tpu.matmul %65, %1, %cst_18 {dimension_numbers = #tpu.dot_dimension_numbers<[1], [0], [0], [1], [0, 0, 1, 1], [], []>} : vector<8x64xf32>, vector<64x128xf32>, vector<8x128xf32> -> vector<8x128xf32>
    %67 = vector.broadcast %3 : vector<1x128xf32> to vector<8x128xf32>
    %68 = arith.addf %66, %67 : vector<8x128xf32>
    %69 = arith.negf %68 : vector<8x128xf32>
    %70 = math.exp %69 : vector<8x128xf32>
    %cst_19 = arith.constant 1.000000e+00 : f32
    %71 = vector.broadcast %cst_19 : f32 to vector<8x128xf32>
    %72 = arith.addf %71, %70 : vector<8x128xf32>
    %73 = arith.divf %71, %72 : vector<8x128xf32>
    %74 = math.tanh %68 : vector<8x128xf32>
    %75 = vector.extract_strided_slice %73 {offsets = [0, 0], sizes = [8, 32], strides = [1, 1]} : vector<8x128xf32> to vector<8x32xf32>
    %76 = vector.extract_strided_slice %73 {offsets = [0, 32], sizes = [8, 32], strides = [1, 1]} : vector<8x128xf32> to vector<8x32xf32>
    %77 = vector.extract_strided_slice %74 {offsets = [0, 64], sizes = [8, 32], strides = [1, 1]} : vector<8x128xf32> to vector<8x32xf32>
    %78 = vector.extract_strided_slice %73 {offsets = [0, 96], sizes = [8, 32], strides = [1, 1]} : vector<8x128xf32> to vector<8x32xf32>
    %79 = arith.mulf %76, %44 : vector<8x32xf32>
    %80 = arith.mulf %75, %77 : vector<8x32xf32>
    %81 = arith.addf %79, %80 : vector<8x32xf32>
    %82 = math.tanh %81 : vector<8x32xf32>
    %83 = arith.mulf %78, %82 : vector<8x32xf32>
    %84 = vector.extract_strided_slice %8 {offsets = [16, 0], sizes = [8, 128], strides = [1, 1]} : vector<64x128xf32> to vector<8x128xf32>
    %cst_20 = arith.constant dense<0.000000e+00> : vector<8x128xf32>
    %85 = tpu.matmul %64, %0, %cst_20 {dimension_numbers = #tpu.dot_dimension_numbers<[1], [0], [0], [1], [0, 0, 1, 1], [], []>} : vector<8x32xf32>, vector<32x128xf32>, vector<8x128xf32> -> vector<8x128xf32>
    %86 = arith.addf %84, %85 : vector<8x128xf32>
    %87 = arith.negf %86 : vector<8x128xf32>
    %88 = math.exp %87 : vector<8x128xf32>
    %cst_21 = arith.constant 1.000000e+00 : f32
    %89 = vector.broadcast %cst_21 : f32 to vector<8x128xf32>
    %90 = arith.addf %89, %88 : vector<8x128xf32>
    %91 = arith.divf %89, %90 : vector<8x128xf32>
    %92 = math.tanh %86 : vector<8x128xf32>
    %93 = vector.extract_strided_slice %91 {offsets = [0, 0], sizes = [8, 32], strides = [1, 1]} : vector<8x128xf32> to vector<8x32xf32>
    %94 = vector.extract_strided_slice %91 {offsets = [0, 32], sizes = [8, 32], strides = [1, 1]} : vector<8x128xf32> to vector<8x32xf32>
    %95 = vector.extract_strided_slice %92 {offsets = [0, 64], sizes = [8, 32], strides = [1, 1]} : vector<8x128xf32> to vector<8x32xf32>
    %96 = vector.extract_strided_slice %91 {offsets = [0, 96], sizes = [8, 32], strides = [1, 1]} : vector<8x128xf32> to vector<8x32xf32>
    %97 = arith.mulf %94, %62 : vector<8x32xf32>
    %98 = arith.mulf %93, %95 : vector<8x32xf32>
    %99 = arith.addf %97, %98 : vector<8x32xf32>
    %100 = math.tanh %99 : vector<8x32xf32>
    %101 = arith.mulf %96, %100 : vector<8x32xf32>
    %102 = tpu.concatenate %101, %83 in 1 : vector<8x32xf32>, vector<8x32xf32> -> vector<8x64xf32>
    %cst_22 = arith.constant dense<0.000000e+00> : vector<8x128xf32>
    %103 = tpu.matmul %102, %1, %cst_22 {dimension_numbers = #tpu.dot_dimension_numbers<[1], [0], [0], [1], [0, 0, 1, 1], [], []>} : vector<8x64xf32>, vector<64x128xf32>, vector<8x128xf32> -> vector<8x128xf32>
    %104 = vector.broadcast %3 : vector<1x128xf32> to vector<8x128xf32>
    %105 = arith.addf %103, %104 : vector<8x128xf32>
    %106 = arith.negf %105 : vector<8x128xf32>
    %107 = math.exp %106 : vector<8x128xf32>
    %cst_23 = arith.constant 1.000000e+00 : f32
    %108 = vector.broadcast %cst_23 : f32 to vector<8x128xf32>
    %109 = arith.addf %108, %107 : vector<8x128xf32>
    %110 = arith.divf %108, %109 : vector<8x128xf32>
    %111 = math.tanh %105 : vector<8x128xf32>
    %112 = vector.extract_strided_slice %110 {offsets = [0, 0], sizes = [8, 32], strides = [1, 1]} : vector<8x128xf32> to vector<8x32xf32>
    %113 = vector.extract_strided_slice %110 {offsets = [0, 32], sizes = [8, 32], strides = [1, 1]} : vector<8x128xf32> to vector<8x32xf32>
    %114 = vector.extract_strided_slice %111 {offsets = [0, 64], sizes = [8, 32], strides = [1, 1]} : vector<8x128xf32> to vector<8x32xf32>
    %115 = vector.extract_strided_slice %110 {offsets = [0, 96], sizes = [8, 32], strides = [1, 1]} : vector<8x128xf32> to vector<8x32xf32>
    %116 = arith.mulf %113, %81 : vector<8x32xf32>
    %117 = arith.mulf %112, %114 : vector<8x32xf32>
    %118 = arith.addf %116, %117 : vector<8x32xf32>
    %119 = math.tanh %118 : vector<8x32xf32>
    %120 = arith.mulf %115, %119 : vector<8x32xf32>
    %121 = vector.extract_strided_slice %8 {offsets = [24, 0], sizes = [8, 128], strides = [1, 1]} : vector<64x128xf32> to vector<8x128xf32>
    %cst_24 = arith.constant dense<0.000000e+00> : vector<8x128xf32>
    %122 = tpu.matmul %101, %0, %cst_24 {dimension_numbers = #tpu.dot_dimension_numbers<[1], [0], [0], [1], [0, 0, 1, 1], [], []>} : vector<8x32xf32>, vector<32x128xf32>, vector<8x128xf32> -> vector<8x128xf32>
    %123 = arith.addf %121, %122 : vector<8x128xf32>
    %124 = arith.negf %123 : vector<8x128xf32>
    %125 = math.exp %124 : vector<8x128xf32>
    %cst_25 = arith.constant 1.000000e+00 : f32
    %126 = vector.broadcast %cst_25 : f32 to vector<8x128xf32>
    %127 = arith.addf %126, %125 : vector<8x128xf32>
    %128 = arith.divf %126, %127 : vector<8x128xf32>
    %129 = math.tanh %123 : vector<8x128xf32>
    %130 = vector.extract_strided_slice %128 {offsets = [0, 0], sizes = [8, 32], strides = [1, 1]} : vector<8x128xf32> to vector<8x32xf32>
    %131 = vector.extract_strided_slice %128 {offsets = [0, 32], sizes = [8, 32], strides = [1, 1]} : vector<8x128xf32> to vector<8x32xf32>
    %132 = vector.extract_strided_slice %129 {offsets = [0, 64], sizes = [8, 32], strides = [1, 1]} : vector<8x128xf32> to vector<8x32xf32>
    %133 = vector.extract_strided_slice %128 {offsets = [0, 96], sizes = [8, 32], strides = [1, 1]} : vector<8x128xf32> to vector<8x32xf32>
    %134 = arith.mulf %131, %99 : vector<8x32xf32>
    %135 = arith.mulf %130, %132 : vector<8x32xf32>
    %136 = arith.addf %134, %135 : vector<8x32xf32>
    %137 = math.tanh %136 : vector<8x32xf32>
    %138 = arith.mulf %133, %137 : vector<8x32xf32>
    %139 = tpu.concatenate %138, %120 in 1 : vector<8x32xf32>, vector<8x32xf32> -> vector<8x64xf32>
    %cst_26 = arith.constant dense<0.000000e+00> : vector<8x128xf32>
    %140 = tpu.matmul %139, %1, %cst_26 {dimension_numbers = #tpu.dot_dimension_numbers<[1], [0], [0], [1], [0, 0, 1, 1], [], []>} : vector<8x64xf32>, vector<64x128xf32>, vector<8x128xf32> -> vector<8x128xf32>
    %141 = vector.broadcast %3 : vector<1x128xf32> to vector<8x128xf32>
    %142 = arith.addf %140, %141 : vector<8x128xf32>
    %143 = arith.negf %142 : vector<8x128xf32>
    %144 = math.exp %143 : vector<8x128xf32>
    %cst_27 = arith.constant 1.000000e+00 : f32
    %145 = vector.broadcast %cst_27 : f32 to vector<8x128xf32>
    %146 = arith.addf %145, %144 : vector<8x128xf32>
    %147 = arith.divf %145, %146 : vector<8x128xf32>
    %148 = math.tanh %142 : vector<8x128xf32>
    %149 = vector.extract_strided_slice %147 {offsets = [0, 0], sizes = [8, 32], strides = [1, 1]} : vector<8x128xf32> to vector<8x32xf32>
    %150 = vector.extract_strided_slice %147 {offsets = [0, 32], sizes = [8, 32], strides = [1, 1]} : vector<8x128xf32> to vector<8x32xf32>
    %151 = vector.extract_strided_slice %148 {offsets = [0, 64], sizes = [8, 32], strides = [1, 1]} : vector<8x128xf32> to vector<8x32xf32>
    %152 = vector.extract_strided_slice %147 {offsets = [0, 96], sizes = [8, 32], strides = [1, 1]} : vector<8x128xf32> to vector<8x32xf32>
    %153 = arith.mulf %150, %118 : vector<8x32xf32>
    %154 = arith.mulf %149, %151 : vector<8x32xf32>
    %155 = arith.addf %153, %154 : vector<8x32xf32>
    %156 = math.tanh %155 : vector<8x32xf32>
    %157 = arith.mulf %152, %156 : vector<8x32xf32>
    %158 = vector.extract_strided_slice %8 {offsets = [32, 0], sizes = [8, 128], strides = [1, 1]} : vector<64x128xf32> to vector<8x128xf32>
    %cst_28 = arith.constant dense<0.000000e+00> : vector<8x128xf32>
    %159 = tpu.matmul %138, %0, %cst_28 {dimension_numbers = #tpu.dot_dimension_numbers<[1], [0], [0], [1], [0, 0, 1, 1], [], []>} : vector<8x32xf32>, vector<32x128xf32>, vector<8x128xf32> -> vector<8x128xf32>
    %160 = arith.addf %158, %159 : vector<8x128xf32>
    %161 = arith.negf %160 : vector<8x128xf32>
    %162 = math.exp %161 : vector<8x128xf32>
    %cst_29 = arith.constant 1.000000e+00 : f32
    %163 = vector.broadcast %cst_29 : f32 to vector<8x128xf32>
    %164 = arith.addf %163, %162 : vector<8x128xf32>
    %165 = arith.divf %163, %164 : vector<8x128xf32>
    %166 = math.tanh %160 : vector<8x128xf32>
    %167 = vector.extract_strided_slice %165 {offsets = [0, 0], sizes = [8, 32], strides = [1, 1]} : vector<8x128xf32> to vector<8x32xf32>
    %168 = vector.extract_strided_slice %165 {offsets = [0, 32], sizes = [8, 32], strides = [1, 1]} : vector<8x128xf32> to vector<8x32xf32>
    %169 = vector.extract_strided_slice %166 {offsets = [0, 64], sizes = [8, 32], strides = [1, 1]} : vector<8x128xf32> to vector<8x32xf32>
    %170 = vector.extract_strided_slice %165 {offsets = [0, 96], sizes = [8, 32], strides = [1, 1]} : vector<8x128xf32> to vector<8x32xf32>
    %171 = arith.mulf %168, %136 : vector<8x32xf32>
    %172 = arith.mulf %167, %169 : vector<8x32xf32>
    %173 = arith.addf %171, %172 : vector<8x32xf32>
    %174 = math.tanh %173 : vector<8x32xf32>
    %175 = arith.mulf %170, %174 : vector<8x32xf32>
    %176 = tpu.concatenate %175, %157 in 1 : vector<8x32xf32>, vector<8x32xf32> -> vector<8x64xf32>
    %cst_30 = arith.constant dense<0.000000e+00> : vector<8x128xf32>
    %177 = tpu.matmul %176, %1, %cst_30 {dimension_numbers = #tpu.dot_dimension_numbers<[1], [0], [0], [1], [0, 0, 1, 1], [], []>} : vector<8x64xf32>, vector<64x128xf32>, vector<8x128xf32> -> vector<8x128xf32>
    %178 = vector.broadcast %3 : vector<1x128xf32> to vector<8x128xf32>
    %179 = arith.addf %177, %178 : vector<8x128xf32>
    %180 = arith.negf %179 : vector<8x128xf32>
    %181 = math.exp %180 : vector<8x128xf32>
    %cst_31 = arith.constant 1.000000e+00 : f32
    %182 = vector.broadcast %cst_31 : f32 to vector<8x128xf32>
    %183 = arith.addf %182, %181 : vector<8x128xf32>
    %184 = arith.divf %182, %183 : vector<8x128xf32>
    %185 = math.tanh %179 : vector<8x128xf32>
    %186 = vector.extract_strided_slice %184 {offsets = [0, 0], sizes = [8, 32], strides = [1, 1]} : vector<8x128xf32> to vector<8x32xf32>
    %187 = vector.extract_strided_slice %184 {offsets = [0, 32], sizes = [8, 32], strides = [1, 1]} : vector<8x128xf32> to vector<8x32xf32>
    %188 = vector.extract_strided_slice %185 {offsets = [0, 64], sizes = [8, 32], strides = [1, 1]} : vector<8x128xf32> to vector<8x32xf32>
    %189 = vector.extract_strided_slice %184 {offsets = [0, 96], sizes = [8, 32], strides = [1, 1]} : vector<8x128xf32> to vector<8x32xf32>
    %190 = arith.mulf %187, %155 : vector<8x32xf32>
    %191 = arith.mulf %186, %188 : vector<8x32xf32>
    %192 = arith.addf %190, %191 : vector<8x32xf32>
    %193 = math.tanh %192 : vector<8x32xf32>
    %194 = arith.mulf %189, %193 : vector<8x32xf32>
    %195 = vector.extract_strided_slice %8 {offsets = [40, 0], sizes = [8, 128], strides = [1, 1]} : vector<64x128xf32> to vector<8x128xf32>
    %cst_32 = arith.constant dense<0.000000e+00> : vector<8x128xf32>
    %196 = tpu.matmul %175, %0, %cst_32 {dimension_numbers = #tpu.dot_dimension_numbers<[1], [0], [0], [1], [0, 0, 1, 1], [], []>} : vector<8x32xf32>, vector<32x128xf32>, vector<8x128xf32> -> vector<8x128xf32>
    %197 = arith.addf %195, %196 : vector<8x128xf32>
    %198 = arith.negf %197 : vector<8x128xf32>
    %199 = math.exp %198 : vector<8x128xf32>
    %cst_33 = arith.constant 1.000000e+00 : f32
    %200 = vector.broadcast %cst_33 : f32 to vector<8x128xf32>
    %201 = arith.addf %200, %199 : vector<8x128xf32>
    %202 = arith.divf %200, %201 : vector<8x128xf32>
    %203 = math.tanh %197 : vector<8x128xf32>
    %204 = vector.extract_strided_slice %202 {offsets = [0, 0], sizes = [8, 32], strides = [1, 1]} : vector<8x128xf32> to vector<8x32xf32>
    %205 = vector.extract_strided_slice %202 {offsets = [0, 32], sizes = [8, 32], strides = [1, 1]} : vector<8x128xf32> to vector<8x32xf32>
    %206 = vector.extract_strided_slice %203 {offsets = [0, 64], sizes = [8, 32], strides = [1, 1]} : vector<8x128xf32> to vector<8x32xf32>
    %207 = vector.extract_strided_slice %202 {offsets = [0, 96], sizes = [8, 32], strides = [1, 1]} : vector<8x128xf32> to vector<8x32xf32>
    %208 = arith.mulf %205, %173 : vector<8x32xf32>
    %209 = arith.mulf %204, %206 : vector<8x32xf32>
    %210 = arith.addf %208, %209 : vector<8x32xf32>
    %211 = math.tanh %210 : vector<8x32xf32>
    %212 = arith.mulf %207, %211 : vector<8x32xf32>
    %213 = tpu.concatenate %212, %194 in 1 : vector<8x32xf32>, vector<8x32xf32> -> vector<8x64xf32>
    %cst_34 = arith.constant dense<0.000000e+00> : vector<8x128xf32>
    %214 = tpu.matmul %213, %1, %cst_34 {dimension_numbers = #tpu.dot_dimension_numbers<[1], [0], [0], [1], [0, 0, 1, 1], [], []>} : vector<8x64xf32>, vector<64x128xf32>, vector<8x128xf32> -> vector<8x128xf32>
    %215 = vector.broadcast %3 : vector<1x128xf32> to vector<8x128xf32>
    %216 = arith.addf %214, %215 : vector<8x128xf32>
    %217 = arith.negf %216 : vector<8x128xf32>
    %218 = math.exp %217 : vector<8x128xf32>
    %cst_35 = arith.constant 1.000000e+00 : f32
    %219 = vector.broadcast %cst_35 : f32 to vector<8x128xf32>
    %220 = arith.addf %219, %218 : vector<8x128xf32>
    %221 = arith.divf %219, %220 : vector<8x128xf32>
    %222 = math.tanh %216 : vector<8x128xf32>
    %223 = vector.extract_strided_slice %221 {offsets = [0, 0], sizes = [8, 32], strides = [1, 1]} : vector<8x128xf32> to vector<8x32xf32>
    %224 = vector.extract_strided_slice %221 {offsets = [0, 32], sizes = [8, 32], strides = [1, 1]} : vector<8x128xf32> to vector<8x32xf32>
    %225 = vector.extract_strided_slice %222 {offsets = [0, 64], sizes = [8, 32], strides = [1, 1]} : vector<8x128xf32> to vector<8x32xf32>
    %226 = vector.extract_strided_slice %221 {offsets = [0, 96], sizes = [8, 32], strides = [1, 1]} : vector<8x128xf32> to vector<8x32xf32>
    %227 = arith.mulf %224, %192 : vector<8x32xf32>
    %228 = arith.mulf %223, %225 : vector<8x32xf32>
    %229 = arith.addf %227, %228 : vector<8x32xf32>
    %230 = math.tanh %229 : vector<8x32xf32>
    %231 = arith.mulf %226, %230 : vector<8x32xf32>
    %232 = vector.extract_strided_slice %8 {offsets = [48, 0], sizes = [8, 128], strides = [1, 1]} : vector<64x128xf32> to vector<8x128xf32>
    %cst_36 = arith.constant dense<0.000000e+00> : vector<8x128xf32>
    %233 = tpu.matmul %212, %0, %cst_36 {dimension_numbers = #tpu.dot_dimension_numbers<[1], [0], [0], [1], [0, 0, 1, 1], [], []>} : vector<8x32xf32>, vector<32x128xf32>, vector<8x128xf32> -> vector<8x128xf32>
    %234 = arith.addf %232, %233 : vector<8x128xf32>
    %235 = arith.negf %234 : vector<8x128xf32>
    %236 = math.exp %235 : vector<8x128xf32>
    %cst_37 = arith.constant 1.000000e+00 : f32
    %237 = vector.broadcast %cst_37 : f32 to vector<8x128xf32>
    %238 = arith.addf %237, %236 : vector<8x128xf32>
    %239 = arith.divf %237, %238 : vector<8x128xf32>
    %240 = math.tanh %234 : vector<8x128xf32>
    %241 = vector.extract_strided_slice %239 {offsets = [0, 0], sizes = [8, 32], strides = [1, 1]} : vector<8x128xf32> to vector<8x32xf32>
    %242 = vector.extract_strided_slice %239 {offsets = [0, 32], sizes = [8, 32], strides = [1, 1]} : vector<8x128xf32> to vector<8x32xf32>
    %243 = vector.extract_strided_slice %240 {offsets = [0, 64], sizes = [8, 32], strides = [1, 1]} : vector<8x128xf32> to vector<8x32xf32>
    %244 = vector.extract_strided_slice %239 {offsets = [0, 96], sizes = [8, 32], strides = [1, 1]} : vector<8x128xf32> to vector<8x32xf32>
    %245 = arith.mulf %242, %210 : vector<8x32xf32>
    %246 = arith.mulf %241, %243 : vector<8x32xf32>
    %247 = arith.addf %245, %246 : vector<8x32xf32>
    %248 = math.tanh %247 : vector<8x32xf32>
    %249 = arith.mulf %244, %248 : vector<8x32xf32>
    %250 = tpu.concatenate %249, %231 in 1 : vector<8x32xf32>, vector<8x32xf32> -> vector<8x64xf32>
    %cst_38 = arith.constant dense<0.000000e+00> : vector<8x128xf32>
    %251 = tpu.matmul %250, %1, %cst_38 {dimension_numbers = #tpu.dot_dimension_numbers<[1], [0], [0], [1], [0, 0, 1, 1], [], []>} : vector<8x64xf32>, vector<64x128xf32>, vector<8x128xf32> -> vector<8x128xf32>
    %252 = vector.broadcast %3 : vector<1x128xf32> to vector<8x128xf32>
    %253 = arith.addf %251, %252 : vector<8x128xf32>
    %254 = arith.negf %253 : vector<8x128xf32>
    %255 = math.exp %254 : vector<8x128xf32>
    %cst_39 = arith.constant 1.000000e+00 : f32
    %256 = vector.broadcast %cst_39 : f32 to vector<8x128xf32>
    %257 = arith.addf %256, %255 : vector<8x128xf32>
    %258 = arith.divf %256, %257 : vector<8x128xf32>
    %259 = math.tanh %253 : vector<8x128xf32>
    %260 = vector.extract_strided_slice %258 {offsets = [0, 0], sizes = [8, 32], strides = [1, 1]} : vector<8x128xf32> to vector<8x32xf32>
    %261 = vector.extract_strided_slice %258 {offsets = [0, 32], sizes = [8, 32], strides = [1, 1]} : vector<8x128xf32> to vector<8x32xf32>
    %262 = vector.extract_strided_slice %259 {offsets = [0, 64], sizes = [8, 32], strides = [1, 1]} : vector<8x128xf32> to vector<8x32xf32>
    %263 = vector.extract_strided_slice %258 {offsets = [0, 96], sizes = [8, 32], strides = [1, 1]} : vector<8x128xf32> to vector<8x32xf32>
    %264 = arith.mulf %261, %229 : vector<8x32xf32>
    %265 = arith.mulf %260, %262 : vector<8x32xf32>
    %266 = arith.addf %264, %265 : vector<8x32xf32>
    %267 = math.tanh %266 : vector<8x32xf32>
    %268 = arith.mulf %263, %267 : vector<8x32xf32>
    %269 = vector.extract_strided_slice %8 {offsets = [56, 0], sizes = [8, 128], strides = [1, 1]} : vector<64x128xf32> to vector<8x128xf32>
    %cst_40 = arith.constant dense<0.000000e+00> : vector<8x128xf32>
    %270 = tpu.matmul %249, %0, %cst_40 {dimension_numbers = #tpu.dot_dimension_numbers<[1], [0], [0], [1], [0, 0, 1, 1], [], []>} : vector<8x32xf32>, vector<32x128xf32>, vector<8x128xf32> -> vector<8x128xf32>
    %271 = arith.addf %269, %270 : vector<8x128xf32>
    %272 = arith.negf %271 : vector<8x128xf32>
    %273 = math.exp %272 : vector<8x128xf32>
    %cst_41 = arith.constant 1.000000e+00 : f32
    %274 = vector.broadcast %cst_41 : f32 to vector<8x128xf32>
    %275 = arith.addf %274, %273 : vector<8x128xf32>
    %276 = arith.divf %274, %275 : vector<8x128xf32>
    %277 = math.tanh %271 : vector<8x128xf32>
    %278 = vector.extract_strided_slice %276 {offsets = [0, 0], sizes = [8, 32], strides = [1, 1]} : vector<8x128xf32> to vector<8x32xf32>
    %279 = vector.extract_strided_slice %276 {offsets = [0, 32], sizes = [8, 32], strides = [1, 1]} : vector<8x128xf32> to vector<8x32xf32>
    %280 = vector.extract_strided_slice %277 {offsets = [0, 64], sizes = [8, 32], strides = [1, 1]} : vector<8x128xf32> to vector<8x32xf32>
    %281 = vector.extract_strided_slice %276 {offsets = [0, 96], sizes = [8, 32], strides = [1, 1]} : vector<8x128xf32> to vector<8x32xf32>
    %282 = arith.mulf %279, %247 : vector<8x32xf32>
    %283 = arith.mulf %278, %280 : vector<8x32xf32>
    %284 = arith.addf %282, %283 : vector<8x32xf32>
    %285 = math.tanh %284 : vector<8x32xf32>
    %286 = arith.mulf %281, %285 : vector<8x32xf32>
    %287 = tpu.concatenate %286, %268 in 1 : vector<8x32xf32>, vector<8x32xf32> -> vector<8x64xf32>
    %cst_42 = arith.constant dense<0.000000e+00> : vector<8x128xf32>
    %288 = tpu.matmul %287, %1, %cst_42 {dimension_numbers = #tpu.dot_dimension_numbers<[1], [0], [0], [1], [0, 0, 1, 1], [], []>} : vector<8x64xf32>, vector<64x128xf32>, vector<8x128xf32> -> vector<8x128xf32>
    %289 = vector.broadcast %3 : vector<1x128xf32> to vector<8x128xf32>
    %290 = arith.addf %288, %289 : vector<8x128xf32>
    %291 = arith.negf %290 : vector<8x128xf32>
    %292 = math.exp %291 : vector<8x128xf32>
    %cst_43 = arith.constant 1.000000e+00 : f32
    %293 = vector.broadcast %cst_43 : f32 to vector<8x128xf32>
    %294 = arith.addf %293, %292 : vector<8x128xf32>
    %295 = arith.divf %293, %294 : vector<8x128xf32>
    %296 = math.tanh %290 : vector<8x128xf32>
    %297 = vector.extract_strided_slice %295 {offsets = [0, 0], sizes = [8, 32], strides = [1, 1]} : vector<8x128xf32> to vector<8x32xf32>
    %298 = vector.extract_strided_slice %295 {offsets = [0, 32], sizes = [8, 32], strides = [1, 1]} : vector<8x128xf32> to vector<8x32xf32>
    %299 = vector.extract_strided_slice %296 {offsets = [0, 64], sizes = [8, 32], strides = [1, 1]} : vector<8x128xf32> to vector<8x32xf32>
    %300 = vector.extract_strided_slice %295 {offsets = [0, 96], sizes = [8, 32], strides = [1, 1]} : vector<8x128xf32> to vector<8x32xf32>
    %301 = arith.mulf %298, %266 : vector<8x32xf32>
    %302 = arith.mulf %297, %299 : vector<8x32xf32>
    %303 = arith.addf %301, %302 : vector<8x32xf32>
    %304 = math.tanh %303 : vector<8x32xf32>
    %305 = arith.mulf %300, %304 : vector<8x32xf32>
    %c0_44 = arith.constant 0 : index
    %c0_45 = arith.constant 0 : index
    %306 = vector.load %arg6[%c0_44, %c0_45] : memref<32x128xf32, #tpu.memory_space<vmem>>, vector<32x128xf32>
    %cst_46 = arith.constant dense<0.000000e+00> : vector<8x128xf32>
    %307 = tpu.matmul %305, %306, %cst_46 {dimension_numbers = #tpu.dot_dimension_numbers<[1], [0], [0], [1], [0, 0, 1, 1], [], []>} : vector<8x32xf32>, vector<32x128xf32>, vector<8x128xf32> -> vector<8x128xf32>
    %c0_47 = arith.constant 0 : index
    %c0_48 = arith.constant 0 : index
    %308 = vector.load %arg7[%c0_47, %c0_48] : memref<1x128xf32, #tpu.memory_space<vmem>>, vector<1x128xf32>
    %309 = vector.broadcast %308 : vector<1x128xf32> to vector<8x128xf32>
    %310 = arith.addf %307, %309 : vector<8x128xf32>
    %cst_49 = arith.constant 0.000000e+00 : f32
    %311 = vector.broadcast %cst_49 : f32 to vector<8x128xf32>
    %312 = arith.maximumf %310, %311 : vector<8x128xf32>
    %c0_50 = arith.constant 0 : index
    %c0_51 = arith.constant 0 : index
    %313 = vector.load %arg8[%c0_50, %c0_51] : memref<8x128xf32, #tpu.memory_space<vmem>>, vector<8x128xf32>
    tpu.vector_store %arg8[%c0_50, %c0_51], %312 {strides = array<i32>} : memref<8x128xf32, #tpu.memory_space<vmem>>, vector<8x128xf32>,
    return
  }
}

</mosaic_0001>

<llo_original>
// kernel: air_model_forward.1
$region0: #{air_model_forward.1}
  #allocation0 [shape = 'u32[]', space=smem, size = 0x4, offset = 0x4, fixed_abs, tag = 'smem constant byte address 0x4 - core index']
  #allocation1 [shape = 'u32[72,128]{1,0:T(1,128)}', space=vmem, size = 0x9000, scoped, tag = 'internal scratch']
  %s0 = inlined_call_operand.vmem [shape: f32[64,4], index: 0, kind: input, shape index: {}]
  %s1 = inlined_call_operand.vmem [shape: f32[4,128], index: 1, kind: input, shape index: {}]
  %s2 = inlined_call_operand.vmem [shape: f32[32,128], index: 2, kind: input, shape index: {}]
  %s3 = inlined_call_operand.vmem [shape: f32[1,128], index: 3, kind: input, shape index: {}]
  %s4 = inlined_call_operand.vmem [shape: f32[64,128], index: 4, kind: input, shape index: {}]
  %s5 = inlined_call_operand.vmem [shape: f32[1,128], index: 5, kind: input, shape index: {}]
  %s6 = inlined_call_operand.vmem [shape: f32[32,128], index: 6, kind: input, shape index: {}]
  %s7 = inlined_call_operand.vmem [shape: f32[1,128], index: 7, kind: input, shape index: {}]
  %s8 = inlined_call_operand.vmem [shape: f32[8,128], index: 8, kind: output, shape index: {}]
  %s9 = sld [smem:[#allocation0]]
  $region42: #{air_model_forward.1} parent=0
    _
  %s11 = ssub.s32 1, %s9
  %s12 = scalar_select 0, %s11, %s9
  // Predicated region
  $region2: #{air_model_forward.1} parent=0 // pred_check
    _
  $region3: #{air_model_forward.1} parent=0 // pred_check_branch
    %14 = sbr.rel (0) target = $region5
  $region4: #{air_model_forward.1} parent=0 // pred_region
    _
  $region5: #{air_model_forward.1} parent=0 // pred_fallthru
    _
  // Predicated region
  $region6: #{air_model_forward.1} parent=0 // pred_check
    _
  $region7: #{air_model_forward.1} parent=0 // pred_check_branch
    %16 = sbr.rel (0) target = $region9
  $region8: #{air_model_forward.1} parent=0 // pred_region
    _
  $region9: #{air_model_forward.1} parent=0 // pred_fallthru
    _
  // Predicated region
  $region10: #{air_model_forward.1} parent=0 // pred_check
    _
  $region11: #{air_model_forward.1} parent=0 // pred_check_branch
    %18 = sbr.rel (0) target = $region13
  $region12: #{air_model_forward.1} parent=0 // pred_region
    _
  $region13: #{air_model_forward.1} parent=0 // pred_fallthru
    _
  // Predicated region
  $region14: #{air_model_forward.1} parent=0 // pred_check
    _
  $region15: #{air_model_forward.1} parent=0 // pred_check_branch
    %20 = sbr.rel (0) target = $region17
  $region16: #{air_model_forward.1} parent=0 // pred_region
    _
  $region17: #{air_model_forward.1} parent=0 // pred_fallthru
    _
  // Predicated region
  $region18: #{air_model_forward.1} parent=0 // pred_check
    _
  $region19: #{air_model_forward.1} parent=0 // pred_check_branch
    %22 = sbr.rel (0) target = $region21
  $region20: #{air_model_forward.1} parent=0 // pred_region
    _
  $region21: #{air_model_forward.1} parent=0 // pred_fallthru
    _
  // Predicated region
  $region22: #{air_model_forward.1} parent=0 // pred_check
    _
  $region23: #{air_model_forward.1} parent=0 // pred_check_branch
    %24 = sbr.rel (0) target = $region25
  $region24: #{air_model_forward.1} parent=0 // pred_region
    _
  $region25: #{air_model_forward.1} parent=0 // pred_fallthru
    _
  // Predicated region
  $region26: #{air_model_forward.1} parent=0 // pred_check
    _
  $region27: #{air_model_forward.1} parent=0 // pred_check_branch
    %26 = sbr.rel (0) target = $region29
  $region28: #{air_model_forward.1} parent=0 // pred_region
    _
  $region29: #{air_model_forward.1} parent=0 // pred_fallthru
    _
  // Predicated region
  $region30: #{air_model_forward.1} parent=0 // pred_check
    _
  $region31: #{air_model_forward.1} parent=0 // pred_check_branch
    %28 = sbr.rel (0) target = $region33
  $region32: #{air_model_forward.1} parent=0 // pred_region
    _
  $region33: #{air_model_forward.1} parent=0 // pred_fallthru
    _
  %v29 = vld [vmem:[%s2] sm:$0xff]
  %v30 = vld [vmem:[%s2 + $0x8] sm:$0xff]
  %v31 = vld [vmem:[%s2 + $0x10] sm:$0xff]
  %v32 = vld [vmem:[%s2 + $0x18] sm:$0xff]
  %v33 = vld [vmem:[%s4] sm:$0xff]
  %v34 = vld [vmem:[%s4 + $0x8] sm:$0xff]
  %v35 = vld [vmem:[%s4 + $0x10] sm:$0xff]
  %v36 = vld [vmem:[%s4 + $0x18] sm:$0xff]
  %v37 = vld [vmem:[%s4 + $0x20] sm:$0xff]
  %v38 = vld [vmem:[%s4 + $0x28] sm:$0xff]
  %v39 = vld [vmem:[%s4 + $0x30] sm:$0xff]
  %v40 = vld [vmem:[%s4 + $0x38] sm:$0xff]
  %v41 = vld [vmem:[%s3] sm:$0x1]
  %v42 = vld [vmem:[%s5] sm:$0x1]
  %v43 = vld [vmem:[%s0] sm:$0xff]
  %v44 = vld [vmem:[%s0 + $0x8] sm:$0xff]
  %v45 = vld [vmem:[%s0 + $0x10] sm:$0xff]
  %v46 = vld [vmem:[%s0 + $0x18] sm:$0xff]
  %v47 = vld [vmem:[%s0 + $0x20] sm:$0xff]
  %v48 = vld [vmem:[%s0 + $0x28] sm:$0xff]
  %v49 = vld [vmem:[%s0 + $0x30] sm:$0xff]
  %v50 = vld [vmem:[%s0 + $0x38] sm:$0xff]
  %v51 = vld [vmem:[%s1] sm:$0xf]
  %v53 = vperm.slane %v41, 0
  %vm55 = vcmask 31744
  %v57 = vsel %vm55, %v43, 0
  %v60 = vsel %vm55, %v44, 0
  %v63 = vsel %vm55, %v45, 0
  %v66 = vsel %vm55, %v46, 0
  %v69 = vsel %vm55, %v47, 0
  %v72 = vsel %vm55, %v48, 0
  %v75 = vsel %vm55, %v49, 0
  %v78 = vsel %vm55, %v50, 0
  %vm80 = vcmask 1043456
  %v82 = vsel %vm80, %v51, 0
  %84 = vmatpush.msra.mxu0 0.0
  %85 = vmatpush.msra.mxu0 0.0
  %86 = vmatpush.msra.mxu0 0.0
  %87 = vmatpush.msra.mxu0 0.0
  %88 = vmatpush.msra.mxu0 0.0
  %89 = vmatpush.msra.mxu0 0.0
  %90 = vmatpush.msra.mxu0 0.0
  %91 = vmatpush.msra.mxu0 0.0
  %92 = vmatpush.msra.mxu0 0.0
  %93 = vmatpush.msra.mxu0 0.0
  %94 = vmatpush.msra.mxu0 0.0
  %95 = vmatpush.msra.mxu0 0.0
  %96 = vmatpush.msra.mxu0 0.0
  %97 = vmatpush.msra.mxu0 0.0
  %98 = vmatpush.msra.mxu0 0.0
  %99 = vmatpush.msra.mxu0 %v82
  %100 = vmatmul.f32.gmra.mxu0 %v57
  %v101 = vpop.f32.mrf.mxu0
  %v102 = vadd.f32 %v53, %v101
  %103 = vmatmul.f32.gmra.mxu0 %v60
  %v104 = vpop.f32.mrf.mxu0
  %v105 = vadd.f32 %v53, %v104
  %106 = vmatmul.f32.gmra.mxu0 %v63
  %v107 = vpop.f32.mrf.mxu0
  %v108 = vadd.f32 %v53, %v107
  %109 = vmatmul.f32.gmra.mxu0 %v66
  %v110 = vpop.f32.mrf.mxu0
  %v111 = vadd.f32 %v53, %v110
  %112 = vmatmul.f32.gmra.mxu0 %v69
  %v113 = vpop.f32.mrf.mxu0
  %v114 = vadd.f32 %v53, %v113
  %115 = vmatmul.f32.gmra.mxu0 %v72
  %v116 = vpop.f32.mrf.mxu0
  %v117 = vadd.f32 %v53, %v116
  %118 = vmatmul.f32.gmra.mxu0 %v75
  %v119 = vpop.f32.mrf.mxu0
  %v120 = vadd.f32 %v53, %v119
  %121 = vmatmul.f32.gmra.mxu0 %v78
  %v122 = vpop.f32.mrf.mxu0
  %v123 = vadd.f32 %v53, %v122
  %124 = vdwg.mxu0
  %vm125 = vcmask 261120
  %v127 = vsel %vm125, 0.0, 0
  %129 = vmatpush.msra.mxu0 0.0
  %130 = vmatpush.msra.mxu0 0.0
  %131 = vmatpush.msra.mxu0 0.0
  %132 = vmatpush.msra.mxu0 0.0
  %133 = vmatpush.msra.mxu0 0.0
  %134 = vmatpush.msra.mxu0 0.0
  %135 = vmatpush.msra.mxu0 0.0
  %136 = vmatpush.msra.mxu0 0.0
  %137 = vmatpush.msra.mxu0 0.0
  %138 = vmatpush.msra.mxu0 0.0
  %139 = vmatpush.msra.mxu0 0.0
  %140 = vmatpush.msra.mxu0 0.0
  %141 = vmatpush.msra.mxu0 %v32
  %142 = vmatpush.msra.mxu0 %v31
  %143 = vmatpush.msra.mxu0 %v30
  %144 = vmatpush.msra.mxu0 %v29
  %145 = vmatmul.f32.gmra.mxu0 %v127
  %v146 = vpop.f32.mrf.mxu0
  %v147 = vadd.f32 0.0, %v146
  %148 = vdwg.mxu0
  %v149 = vadd.f32 %v102, %v147
  %v150 = vxor.u32 %v149, 2147483648
  %v151 = vmul.f32 %v150, 1.442695
  %v152 = vpow.pop %v151
  %v153 = vadd.f32 %v152, 1.0
  %v154 = vrcp.pop %v153
  %v155 = vmul.f32 %v153, %v154
  %v156 = vsub.f32 1.0, %v155
  %v157 = vmul.f32 %v154, %v156
  %v158 = vadd.f32 %v154, %v157
  %vm159 = vweird.f32 %v153
  %vm160 = vweird.f32 %v154
  %vm161 = vmor %vm159, %vm160
  %v162 = vsel %vm161, %v154, %v158
  %v163 = vand.u32 2147483647, %v153
  %vm164 = vcmp.eq.f32.partialorder %v163, 8.507059e+37
  %v165 = vand.u32 %v153, 2147483648
  %v166 = vor.u32 1.1754944e-38, %v165
  %v167 = vsel %vm164, %v166, %v162
  %v168 = vmul.f32 1.0, %v167
  %v169 = vtanh.pop %v149
  %v170 = vmul.f32 %v168, 0.0
  %172 = vrot.lane.b32.xlu0 %v169, 64
  %v173 = vpop.permute.xlu0 %172
  %v175 = vmul.f32 %v168, %v173
  %177 = vrot.lane.b32.xlu0 %v175, 32
  %v178 = vpop.permute.xlu0 %177
  %v180 = vadd.f32 %v170, %v178
  %v181 = vtanh.pop %v180
  %183 = vrot.lane.b32.xlu0 %v181, 64
  %v184 = vpop.permute.xlu0 %183
  %v186 = vmul.f32 %v168, %v184
  %188 = vrot.lane.b32.xlu0 %v186, 32
  %v189 = vpop.permute.xlu0 %188
  %v191 = vsel %vm125, %v189, 0.0
  %v193 = vperm.slane %v42, 0
  %vm195 = vcmask 523264
  %v197 = vsel %vm195, %v191, 0
  %199 = vmatpush.msra.mxu0 0.0
  %200 = vmatpush.msra.mxu0 0.0
  %201 = vmatpush.msra.mxu0 0.0
  %202 = vmatpush.msra.mxu0 0.0
  %203 = vmatpush.msra.mxu0 0.0
  %204 = vmatpush.msra.mxu0 0.0
  %205 = vmatpush.msra.mxu0 0.0
  %206 = vmatpush.msra.mxu0 0.0
  %207 = vmatpush.msra.mxu0 %v40
  %208 = vmatpush.msra.mxu0 %v39
  %209 = vmatpush.msra.mxu0 %v38
  %210 = vmatpush.msra.mxu0 %v37
  %211 = vmatpush.msra.mxu0 %v36
  %212 = vmatpush.msra.mxu0 %v35
  %213 = vmatpush.msra.mxu0 %v34
  %214 = vmatpush.msra.mxu0 %v33
  %215 = vmatmul.f32.gmra.mxu0 %v197
  %v216 = vpop.f32.mrf.mxu0
  %v217 = vadd.f32 %v193, %v216
  %218 = vdwg.mxu0
  %v219 = vxor.u32 %v217, 2147483648
  %v220 = vmul.f32 %v219, 1.442695
  %v221 = vpow.pop %v220
  %v222 = vadd.f32 %v221, 1.0
  %v223 = vrcp.pop %v222
  %v224 = vmul.f32 %v222, %v223
  %v225 = vsub.f32 1.0, %v224
  %v226 = vmul.f32 %v223, %v225
  %v227 = vadd.f32 %v223, %v226
  %vm228 = vweird.f32 %v222
  %vm229 = vweird.f32 %v223
  %vm230 = vmor %vm228, %vm229
  %v231 = vsel %vm230, %v223, %v227
  %v232 = vand.u32 2147483647, %v222
  %vm233 = vcmp.eq.f32.partialorder %v232, 8.507059e+37
  %v234 = vand.u32 %v222, 2147483648
  %v235 = vor.u32 1.1754944e-38, %v234
  %v236 = vsel %vm233, %v235, %v231
  %v237 = vmul.f32 1.0, %v236
  %v238 = vtanh.pop %v217
  %v239 = vmul.f32 %v237, 0.0
  %241 = vrot.lane.b32.xlu0 %v238, 64
  %v242 = vpop.permute.xlu0 %241
  %v244 = vmul.f32 %v237, %v242
  %246 = vrot.lane.b32.xlu0 %v244, 32
  %v247 = vpop.permute.xlu0 %246
  %v249 = vadd.f32 %v239, %v247
  %v250 = vtanh.pop %v249
  %252 = vrot.lane.b32.xlu0 %v250, 64
  %v253 = vpop.permute.xlu0 %252
  %v255 = vmul.f32 %v237, %v253
  %v256 = vsel %vm125, %v189, 0
  %258 = vmatpush.msra.mxu0 0.0
  %259 = vmatpush.msra.mxu0 0.0
  %260 = vmatpush.msra.mxu0 0.0
  %261 = vmatpush.msra.mxu0 0.0
  %262 = vmatpush.msra.mxu0 0.0
  %263 = vmatpush.msra.mxu0 0.0
  %264 = vmatpush.msra.mxu0 0.0
  %265 = vmatpush.msra.mxu0 0.0
  %266 = vmatpush.msra.mxu0 0.0
  %267 = vmatpush.msra.mxu0 0.0
  %268 = vmatpush.msra.mxu0 0.0
  %269 = vmatpush.msra.mxu0 0.0
  %270 = vmatpush.msra.mxu0 %v32
  %271 = vmatpush.msra.mxu0 %v31
  %272 = vmatpush.msra.mxu0 %v30
  %273 = vmatpush.msra.mxu0 %v29
  %274 = vmatmul.f32.gmra.mxu0 %v256
  %v275 = vpop.f32.mrf.mxu0
  %v276 = vadd.f32 0.0, %v275
  %277 = vdwg.mxu0
  %v278 = vadd.f32 %v105, %v276
  %v279 = vxor.u32 %v278, 2147483648
  %v280 = vmul.f32 %v279, 1.442695
  %v281 = vpow.pop %v280
  %v282 = vadd.f32 %v281, 1.0
  %v283 = vrcp.pop %v282
  %v284 = vmul.f32 %v282, %v283
  %v285 = vsub.f32 1.0, %v284
  %v286 = vmul.f32 %v283, %v285
  %v287 = vadd.f32 %v283, %v286
  %vm288 = vweird.f32 %v282
  %vm289 = vweird.f32 %v283
  %vm290 = vmor %vm288, %vm289
  %v291 = vsel %vm290, %v283, %v287
  %v292 = vand.u32 2147483647, %v282
  %vm293 = vcmp.eq.f32.partialorder %v292, 8.507059e+37
  %v294 = vand.u32 %v282, 2147483648
  %v295 = vor.u32 1.1754944e-38, %v294
  %v296 = vsel %vm293, %v295, %v291
  %v297 = vmul.f32 1.0, %v296
  %v298 = vtanh.pop %v278
  %v299 = vmul.f32 %v297, %v180
  %301 = vrot.lane.b32.xlu0 %v298, 64
  %v302 = vpop.permute.xlu0 %301
  %v304 = vmul.f32 %v297, %v302
  %306 = vrot.lane.b32.xlu0 %v304, 32
  %v307 = vpop.permute.xlu0 %306
  %v309 = vadd.f32 %v299, %v307
  %v310 = vtanh.pop %v309
  %312 = vrot.lane.b32.xlu0 %v310, 64
  %v313 = vpop.permute.xlu0 %312
  %v315 = vmul.f32 %v297, %v313
  %317 = vrot.lane.b32.xlu0 %v315, 32
  %v318 = vpop.permute.xlu0 %317
  %321 = vrot.lane.b32.xlu0 %v255, 64
  %v322 = vpop.permute.xlu0 %321
  %v324 = vsel %vm125, %v318, %v322
  %v326 = vsel %vm195, %v324, 0
  %328 = vmatpush.msra.mxu0 0.0
  %329 = vmatpush.msra.mxu0 0.0
  %330 = vmatpush.msra.mxu0 0.0
  %331 = vmatpush.msra.mxu0 0.0
  %332 = vmatpush.msra.mxu0 0.0
  %333 = vmatpush.msra.mxu0 0.0
  %334 = vmatpush.msra.mxu0 0.0
  %335 = vmatpush.msra.mxu0 0.0
  %336 = vmatpush.msra.mxu0 %v40
  %337 = vmatpush.msra.mxu0 %v39
  %338 = vmatpush.msra.mxu0 %v38
  %339 = vmatpush.msra.mxu0 %v37
  %340 = vmatpush.msra.mxu0 %v36
  %341 = vmatpush.msra.mxu0 %v35
  %342 = vmatpush.msra.mxu0 %v34
  %343 = vmatpush.msra.mxu0 %v33
  %344 = vmatmul.f32.gmra.mxu0 %v326
  %v345 = vpop.f32.mrf.mxu0
  %v346 = vadd.f32 %v193, %v345
  %347 = vdwg.mxu0
  %v348 = vxor.u32 %v346, 2147483648
  %v349 = vmul.f32 %v348, 1.442695
  %v350 = vpow.pop %v349
  %v351 = vadd.f32 %v350, 1.0
  %v352 = vrcp.pop %v351
  %v353 = vmul.f32 %v351, %v352
  %v354 = vsub.f32 1.0, %v353
  %v355 = vmul.f32 %v352, %v354
  %v356 = vadd.f32 %v352, %v355
  %vm357 = vweird.f32 %v351
  %vm358 = vweird.f32 %v352
  %vm359 = vmor %vm357, %vm358
  %v360 = vsel %vm359, %v352, %v356
  %v361 = vand.u32 2147483647, %v351
  %vm362 = vcmp.eq.f32.partialorder %v361, 8.507059e+37
  %v363 = vand.u32 %v351, 2147483648
  %v364 = vor.u32 1.1754944e-38, %v363
  %v365 = vsel %vm362, %v364, %v360
  %v366 = vmul.f32 1.0, %v365
  %v367 = vtanh.pop %v346
  %v368 = vmul.f32 %v366, %v249
  %370 = vrot.lane.b32.xlu0 %v367, 64
  %v371 = vpop.permute.xlu0 %370
  %v373 = vmul.f32 %v366, %v371
  %375 = vrot.lane.b32.xlu0 %v373, 32
  %v376 = vpop.permute.xlu0 %375
  %v378 = vadd.f32 %v368, %v376
  %v379 = vtanh.pop %v378
  %381 = vrot.lane.b32.xlu0 %v379, 64
  %v382 = vpop.permute.xlu0 %381
  %v384 = vmul.f32 %v366, %v382
  %v385 = vsel %vm125, %v318, 0
  %387 = vmatpush.msra.mxu0 0.0
  %388 = vmatpush.msra.mxu0 0.0
  %389 = vmatpush.msra.mxu0 0.0
  %390 = vmatpush.msra.mxu0 0.0
  %391 = vmatpush.msra.mxu0 0.0
  %392 = vmatpush.msra.mxu0 0.0
  %393 = vmatpush.msra.mxu0 0.0
  %394 = vmatpush.msra.mxu0 0.0
  %395 = vmatpush.msra.mxu0 0.0
  %396 = vmatpush.msra.mxu0 0.0
  %397 = vmatpush.msra.mxu0 0.0
  %398 = vmatpush.msra.mxu0 0.0
  %399 = vmatpush.msra.mxu0 %v32
  %400 = vmatpush.msra.mxu0 %v31
  %401 = vmatpush.msra.mxu0 %v30
  %402 = vmatpush.msra.mxu0 %v29
  %403 = vmatmul.f32.gmra.mxu0 %v385
  %v404 = vpop.f32.mrf.mxu0
  %v405 = vadd.f32 0.0, %v404
  %406 = vdwg.mxu0
  %v407 = vadd.f32 %v108, %v405
  %v408 = vxor.u32 %v407, 2147483648
  %v409 = vmul.f32 %v408, 1.442695
  %v410 = vpow.pop %v409
  %v411 = vadd.f32 %v410, 1.0
  %v412 = vrcp.pop %v411
  %v413 = vmul.f32 %v411, %v412
  %v414 = vsub.f32 1.0, %v413
  %v415 = vmul.f32 %v412, %v414
  %v416 = vadd.f32 %v412, %v415
  %vm417 = vweird.f32 %v411
  %vm418 = vweird.f32 %v412
  %vm419 = vmor %vm417, %vm418
  %v420 = vsel %vm419, %v412, %v416
  %v421 = vand.u32 2147483647, %v411
  %vm422 = vcmp.eq.f32.partialorder %v421, 8.507059e+37
  %v423 = vand.u32 %v411, 2147483648
  %v424 = vor.u32 1.1754944e-38, %v423
  %v425 = vsel %vm422, %v424, %v420
  %v426 = vmul.f32 1.0, %v425
  %v427 = vtanh.pop %v407
  %v428 = vmul.f32 %v426, %v309
  %430 = vrot.lane.b32.xlu0 %v427, 64
  %v431 = vpop.permute.xlu0 %430
  %v433 = vmul.f32 %v426, %v431
  %435 = vrot.lane.b32.xlu0 %v433, 32
  %v436 = vpop.permute.xlu0 %435
  %v438 = vadd.f32 %v428, %v436
  %v439 = vtanh.pop %v438
  %441 = vrot.lane.b32.xlu0 %v439, 64
  %v442 = vpop.permute.xlu0 %441
  %v444 = vmul.f32 %v426, %v442
  %446 = vrot.lane.b32.xlu0 %v444, 32
  %v447 = vpop.permute.xlu0 %446
  %450 = vrot.lane.b32.xlu0 %v384, 64
  %v451 = vpop.permute.xlu0 %450
  %v453 = vsel %vm125, %v447, %v451
  %v455 = vsel %vm195, %v453, 0
  %457 = vmatpush.msra.mxu0 0.0
  %458 = vmatpush.msra.mxu0 0.0
  %459 = vmatpush.msra.mxu0 0.0
  %460 = vmatpush.msra.mxu0 0.0
  %461 = vmatpush.msra.mxu0 0.0
  %462 = vmatpush.msra.mxu0 0.0
  %463 = vmatpush.msra.mxu0 0.0
  %464 = vmatpush.msra.mxu0 0.0
  %465 = vmatpush.msra.mxu0 %v40
  %466 = vmatpush.msra.mxu0 %v39
  %467 = vmatpush.msra.mxu0 %v38
  %468 = vmatpush.msra.mxu0 %v37
  %469 = vmatpush.msra.mxu0 %v36
  %470 = vmatpush.msra.mxu0 %v35
  %471 = vmatpush.msra.mxu0 %v34
  %472 = vmatpush.msra.mxu0 %v33
  %473 = vmatmul.f32.gmra.mxu0 %v455
  %v474 = vpop.f32.mrf.mxu0
  %v475 = vadd.f32 %v193, %v474
  %476 = vdwg.mxu0
  %v477 = vxor.u32 %v475, 2147483648
  %v478 = vmul.f32 %v477, 1.442695
  %v479 = vpow.pop %v478
  %v480 = vadd.f32 %v479, 1.0
  %v481 = vrcp.pop %v480
  %v482 = vmul.f32 %v480, %v481
  %v483 = vsub.f32 1.0, %v482
  %v484 = vmul.f32 %v481, %v483
  %v485 = vadd.f32 %v481, %v484
  %vm486 = vweird.f32 %v480
  %vm487 = vweird.f32 %v481
  %vm488 = vmor %vm486, %vm487
  %v489 = vsel %vm488, %v481, %v485
  %v490 = vand.u32 2147483647, %v480
  %vm491 = vcmp.eq.f32.partialorder %v490, 8.507059e+37
  %v492 = vand.u32 %v480, 2147483648
  %v493 = vor.u32 1.1754944e-38, %v492
  %v494 = vsel %vm491, %v493, %v489
  %v495 = vmul.f32 1.0, %v494
  %v496 = vtanh.pop %v475
  %v497 = vmul.f32 %v495, %v378
  %499 = vrot.lane.b32.xlu0 %v496, 64
  %v500 = vpop.permute.xlu0 %499
  %v502 = vmul.f32 %v495, %v500
  %504 = vrot.lane.b32.xlu0 %v502, 32
  %v505 = vpop.permute.xlu0 %504
  %v507 = vadd.f32 %v497, %v505
  %v508 = vtanh.pop %v507
  %510 = vrot.lane.b32.xlu0 %v508, 64
  %v511 = vpop.permute.xlu0 %510
  %v513 = vmul.f32 %v495, %v511
  %v514 = vsel %vm125, %v447, 0
  %516 = vmatpush.msra.mxu0 0.0
  %517 = vmatpush.msra.mxu0 0.0
  %518 = vmatpush.msra.mxu0 0.0
  %519 = vmatpush.msra.mxu0 0.0
  %520 = vmatpush.msra.mxu0 0.0
  %521 = vmatpush.msra.mxu0 0.0
  %522 = vmatpush.msra.mxu0 0.0
  %523 = vmatpush.msra.mxu0 0.0
  %524 = vmatpush.msra.mxu0 0.0
  %525 = vmatpush.msra.mxu0 0.0
  %526 = vmatpush.msra.mxu0 0.0
  %527 = vmatpush.msra.mxu0 0.0
  %528 = vmatpush.msra.mxu0 %v32
  %529 = vmatpush.msra.mxu0 %v31
  %530 = vmatpush.msra.mxu0 %v30
  %531 = vmatpush.msra.mxu0 %v29
  %532 = vmatmul.f32.gmra.mxu0 %v514
  %v533 = vpop.f32.mrf.mxu0
  %v534 = vadd.f32 0.0, %v533
  %535 = vdwg.mxu0
  %v536 = vadd.f32 %v111, %v534
  %v537 = vxor.u32 %v536, 2147483648
  %v538 = vmul.f32 %v537, 1.442695
  %v539 = vpow.pop %v538
  %v540 = vadd.f32 %v539, 1.0
  %v541 = vrcp.pop %v540
  %v542 = vmul.f32 %v540, %v541
  %v543 = vsub.f32 1.0, %v542
  %v544 = vmul.f32 %v541, %v543
  %v545 = vadd.f32 %v541, %v544
  %vm546 = vweird.f32 %v540
  %vm547 = vweird.f32 %v541
  %vm548 = vmor %vm546, %vm547
  %v549 = vsel %vm548, %v541, %v545
  %v550 = vand.u32 2147483647, %v540
  %vm551 = vcmp.eq.f32.partialorder %v550, 8.507059e+37
  %v552 = vand.u32 %v540, 2147483648
  %v553 = vor.u32 1.1754944e-38, %v552
  %v554 = vsel %vm551, %v553, %v549
  %v555 = vmul.f32 1.0, %v554
  %v556 = vtanh.pop %v536
  %v557 = vmul.f32 %v555, %v438
  %559 = vrot.lane.b32.xlu0 %v556, 64
  %v560 = vpop.permute.xlu0 %559
  %v562 = vmul.f32 %v555, %v560
  %564 = vrot.lane.b32.xlu0 %v562, 32
  %v565 = vpop.permute.xlu0 %564
  %v567 = vadd.f32 %v557, %v565
  %v568 = vtanh.pop %v567
  %570 = vrot.lane.b32.xlu0 %v568, 64
  %v571 = vpop.permute.xlu0 %570
  %v573 = vmul.f32 %v555, %v571
  %575 = vrot.lane.b32.xlu0 %v573, 32
  %v576 = vpop.permute.xlu0 %575
  %579 = vrot.lane.b32.xlu0 %v513, 64
  %v580 = vpop.permute.xlu0 %579
  %v582 = vsel %vm125, %v576, %v580
  %v584 = vsel %vm195, %v582, 0
  %586 = vmatpush.msra.mxu0 0.0
  %587 = vmatpush.msra.mxu0 0.0
  %588 = vmatpush.msra.mxu0 0.0
  %589 = vmatpush.msra.mxu0 0.0
  %590 = vmatpush.msra.mxu0 0.0
  %591 = vmatpush.msra.mxu0 0.0
  %592 = vmatpush.msra.mxu0 0.0
  %593 = vmatpush.msra.mxu0 0.0
  %594 = vmatpush.msra.mxu0 %v40
  %595 = vmatpush.msra.mxu0 %v39
  %596 = vmatpush.msra.mxu0 %v38
  %597 = vmatpush.msra.mxu0 %v37
  %598 = vmatpush.msra.mxu0 %v36
  %599 = vmatpush.msra.mxu0 %v35
  %600 = vmatpush.msra.mxu0 %v34
  %601 = vmatpush.msra.mxu0 %v33
  %602 = vmatmul.f32.gmra.mxu0 %v584
  %v603 = vpop.f32.mrf.mxu0
  %v604 = vadd.f32 %v193, %v603
  %605 = vdwg.mxu0
  %v606 = vxor.u32 %v604, 2147483648
  %v607 = vmul.f32 %v606, 1.442695
  %v608 = vpow.pop %v607
  %v609 = vadd.f32 %v608, 1.0
  %v610 = vrcp.pop %v609
  %v611 = vmul.f32 %v609, %v610
  %v612 = vsub.f32 1.0, %v611
  %v613 = vmul.f32 %v610, %v612
  %v614 = vadd.f32 %v610, %v613
  %vm615 = vweird.f32 %v609
  %vm616 = vweird.f32 %v610
  %vm617 = vmor %vm615, %vm616
  %v618 = vsel %vm617, %v610, %v614
  %v619 = vand.u32 2147483647, %v609
  %vm620 = vcmp.eq.f32.partialorder %v619, 8.507059e+37
  %v621 = vand.u32 %v609, 2147483648
  %v622 = vor.u32 1.1754944e-38, %v621
  %v623 = vsel %vm620, %v622, %v618
  %v624 = vmul.f32 1.0, %v623
  %v625 = vtanh.pop %v604
  %v626 = vmul.f32 %v624, %v507
  %628 = vrot.lane.b32.xlu0 %v625, 64
  %v629 = vpop.permute.xlu0 %628
  %v631 = vmul.f32 %v624, %v629
  %633 = vrot.lane.b32.xlu0 %v631, 32
  %v634 = vpop.permute.xlu0 %633
  %v636 = vadd.f32 %v626, %v634
  %v637 = vtanh.pop %v636
  %639 = vrot.lane.b32.xlu0 %v637, 64
  %v640 = vpop.permute.xlu0 %639
  %v642 = vmul.f32 %v624, %v640
  %v643 = vsel %vm125, %v576, 0
  %645 = vmatpush.msra.mxu0 0.0
  %646 = vmatpush.msra.mxu0 0.0
  %647 = vmatpush.msra.mxu0 0.0
  %648 = vmatpush.msra.mxu0 0.0
  %649 = vmatpush.msra.mxu0 0.0
  %650 = vmatpush.msra.mxu0 0.0
  %651 = vmatpush.msra.mxu0 0.0
  %652 = vmatpush.msra.mxu0 0.0
  %653 = vmatpush.msra.mxu0 0.0
  %654 = vmatpush.msra.mxu0 0.0
  %655 = vmatpush.msra.mxu0 0.0
  %656 = vmatpush.msra.mxu0 0.0
  %657 = vmatpush.msra.mxu0 %v32
  %658 = vmatpush.msra.mxu0 %v31
  %659 = vmatpush.msra.mxu0 %v30
  %660 = vmatpush.msra.mxu0 %v29
  %661 = vmatmul.f32.gmra.mxu0 %v643
  %v662 = vpop.f32.mrf.mxu0
  %v663 = vadd.f32 0.0, %v662
  %664 = vdwg.mxu0
  %v665 = vadd.f32 %v114, %v663
  %v666 = vxor.u32 %v665, 2147483648
  %v667 = vmul.f32 %v666, 1.442695
  %v668 = vpow.pop %v667
  %v669 = vadd.f32 %v668, 1.0
  %v670 = vrcp.pop %v669
  %v671 = vmul.f32 %v669, %v670
  %v672 = vsub.f32 1.0, %v671
  %v673 = vmul.f32 %v670, %v672
  %v674 = vadd.f32 %v670, %v673
  %vm675 = vweird.f32 %v669
  %vm676 = vweird.f32 %v670
  %vm677 = vmor %vm675, %vm676
  %v678 = vsel %vm677, %v670, %v674
  %v679 = vand.u32 2147483647, %v669
  %vm680 = vcmp.eq.f32.partialorder %v679, 8.507059e+37
  %v681 = vand.u32 %v669, 2147483648
  %v682 = vor.u32 1.1754944e-38, %v681
  %v683 = vsel %vm680, %v682, %v678
  %v684 = vmul.f32 1.0, %v683
  %v685 = vtanh.pop %v665
  %v686 = vmul.f32 %v684, %v567
  %688 = vrot.lane.b32.xlu0 %v685, 64
  %v689 = vpop.permute.xlu0 %688
  %v691 = vmul.f32 %v684, %v689
  %693 = vrot.lane.b32.xlu0 %v691, 32
  %v694 = vpop.permute.xlu0 %693
  %v696 = vadd.f32 %v686, %v694
  %v697 = vtanh.pop %v696
  %699 = vrot.lane.b32.xlu0 %v697, 64
  %v700 = vpop.permute.xlu0 %699
  %v702 = vmul.f32 %v684, %v700
  %704 = vrot.lane.b32.xlu0 %v702, 32
  %v705 = vpop.permute.xlu0 %704
  %708 = vrot.lane.b32.xlu0 %v642, 64
  %v709 = vpop.permute.xlu0 %708
  %v711 = vsel %vm125, %v705, %v709
  %v713 = vsel %vm195, %v711, 0
  %715 = vmatpush.msra.mxu0 0.0
  %716 = vmatpush.msra.mxu0 0.0
  %717 = vmatpush.msra.mxu0 0.0
  %718 = vmatpush.msra.mxu0 0.0
  %719 = vmatpush.msra.mxu0 0.0
  %720 = vmatpush.msra.mxu0 0.0
  %721 = vmatpush.msra.mxu0 0.0
  %722 = vmatpush.msra.mxu0 0.0
  %723 = vmatpush.msra.mxu0 %v40
  %724 = vmatpush.msra.mxu0 %v39
  %725 = vmatpush.msra.mxu0 %v38
  %726 = vmatpush.msra.mxu0 %v37
  %727 = vmatpush.msra.mxu0 %v36
  %728 = vmatpush.msra.mxu0 %v35
  %729 = vmatpush.msra.mxu0 %v34
  %730 = vmatpush.msra.mxu0 %v33
  %731 = vmatmul.f32.gmra.mxu0 %v713
  %v732 = vpop.f32.mrf.mxu0
  %v733 = vadd.f32 %v193, %v732
  %734 = vdwg.mxu0
  %v735 = vxor.u32 %v733, 2147483648
  %v736 = vmul.f32 %v735, 1.442695
  %v737 = vpow.pop %v736
  %v738 = vadd.f32 %v737, 1.0
  %v739 = vrcp.pop %v738
  %v740 = vmul.f32 %v738, %v739
  %v741 = vsub.f32 1.0, %v740
  %v742 = vmul.f32 %v739, %v741
  %v743 = vadd.f32 %v739, %v742
  %vm744 = vweird.f32 %v738
  %vm745 = vweird.f32 %v739
  %vm746 = vmor %vm744, %vm745
  %v747 = vsel %vm746, %v739, %v743
  %v748 = vand.u32 2147483647, %v738
  %vm749 = vcmp.eq.f32.partialorder %v748, 8.507059e+37
  %v750 = vand.u32 %v738, 2147483648
  %v751 = vor.u32 1.1754944e-38, %v750
  %v752 = vsel %vm749, %v751, %v747
  %v753 = vmul.f32 1.0, %v752
  %v754 = vtanh.pop %v733
  %v755 = vmul.f32 %v753, %v636
  %757 = vrot.lane.b32.xlu0 %v754, 64
  %v758 = vpop.permute.xlu0 %757
  %v760 = vmul.f32 %v753, %v758
  %762 = vrot.lane.b32.xlu0 %v760, 32
  %v763 = vpop.permute.xlu0 %762
  %v765 = vadd.f32 %v755, %v763
  %v766 = vtanh.pop %v765
  %768 = vrot.lane.b32.xlu0 %v766, 64
  %v769 = vpop.permute.xlu0 %768
  %v771 = vmul.f32 %v753, %v769
  %v772 = vsel %vm125, %v705, 0
  %774 = vmatpush.msra.mxu0 0.0
  %775 = vmatpush.msra.mxu0 0.0
  %776 = vmatpush.msra.mxu0 0.0
  %777 = vmatpush.msra.mxu0 0.0
  %778 = vmatpush.msra.mxu0 0.0
  %779 = vmatpush.msra.mxu0 0.0
  %780 = vmatpush.msra.mxu0 0.0
  %781 = vmatpush.msra.mxu0 0.0
  %782 = vmatpush.msra.mxu0 0.0
  %783 = vmatpush.msra.mxu0 0.0
  %784 = vmatpush.msra.mxu0 0.0
  %785 = vmatpush.msra.mxu0 0.0
  %786 = vmatpush.msra.mxu0 %v32
  %787 = vmatpush.msra.mxu0 %v31
  %788 = vmatpush.msra.mxu0 %v30
  %789 = vmatpush.msra.mxu0 %v29
  %790 = vmatmul.f32.gmra.mxu0 %v772
  %v791 = vpop.f32.mrf.mxu0
  %v792 = vadd.f32 0.0, %v791
  %793 = vdwg.mxu0
  %v794 = vadd.f32 %v117, %v792
  %v795 = vxor.u32 %v794, 2147483648
  %v796 = vmul.f32 %v795, 1.442695
  %v797 = vpow.pop %v796
  %v798 = vadd.f32 %v797, 1.0
  %v799 = vrcp.pop %v798
  %v800 = vmul.f32 %v798, %v799
  %v801 = vsub.f32 1.0, %v800
  %v802 = vmul.f32 %v799, %v801
  %v803 = vadd.f32 %v799, %v802
  %vm804 = vweird.f32 %v798
  %vm805 = vweird.f32 %v799
  %vm806 = vmor %vm804, %vm805
  %v807 = vsel %vm806, %v799, %v803
  %v808 = vand.u32 2147483647, %v798
  %vm809 = vcmp.eq.f32.partialorder %v808, 8.507059e+37
  %v810 = vand.u32 %v798, 2147483648
  %v811 = vor.u32 1.1754944e-38, %v810
  %v812 = vsel %vm809, %v811, %v807
  %v813 = vmul.f32 1.0, %v812
  %v814 = vtanh.pop %v794
  %v815 = vmul.f32 %v813, %v696
  %817 = vrot.lane.b32.xlu0 %v814, 64
  %v818 = vpop.permute.xlu0 %817
  %v820 = vmul.f32 %v813, %v818
  %822 = vrot.lane.b32.xlu0 %v820, 32
  %v823 = vpop.permute.xlu0 %822
  %v825 = vadd.f32 %v815, %v823
  %v826 = vtanh.pop %v825
  %828 = vrot.lane.b32.xlu0 %v826, 64
  %v829 = vpop.permute.xlu0 %828
  %v831 = vmul.f32 %v813, %v829
  %833 = vrot.lane.b32.xlu0 %v831, 32
  %v834 = vpop.permute.xlu0 %833
  %837 = vrot.lane.b32.xlu0 %v771, 64
  %v838 = vpop.permute.xlu0 %837
  %v840 = vsel %vm125, %v834, %v838
  %v842 = vsel %vm195, %v840, 0
  %844 = vmatpush.msra.mxu0 0.0
  %845 = vmatpush.msra.mxu0 0.0
  %846 = vmatpush.msra.mxu0 0.0
  %847 = vmatpush.msra.mxu0 0.0
  %848 = vmatpush.msra.mxu0 0.0
  %849 = vmatpush.msra.mxu0 0.0
  %850 = vmatpush.msra.mxu0 0.0
  %851 = vmatpush.msra.mxu0 0.0
  %852 = vmatpush.msra.mxu0 %v40
  %853 = vmatpush.msra.mxu0 %v39
  %854 = vmatpush.msra.mxu0 %v38
  %855 = vmatpush.msra.mxu0 %v37
  %856 = vmatpush.msra.mxu0 %v36
  %857 = vmatpush.msra.mxu0 %v35
  %858 = vmatpush.msra.mxu0 %v34
  %859 = vmatpush.msra.mxu0 %v33
  %860 = vmatmul.f32.gmra.mxu0 %v842
  %v861 = vpop.f32.mrf.mxu0
  %v862 = vadd.f32 %v193, %v861
  %863 = vdwg.mxu0
  %v864 = vxor.u32 %v862, 2147483648
  %v865 = vmul.f32 %v864, 1.442695
  %v866 = vpow.pop %v865
  %v867 = vadd.f32 %v866, 1.0
  %v868 = vrcp.pop %v867
  %v869 = vmul.f32 %v867, %v868
  %v870 = vsub.f32 1.0, %v869
  %v871 = vmul.f32 %v868, %v870
  %v872 = vadd.f32 %v868, %v871
  %vm873 = vweird.f32 %v867
  %vm874 = vweird.f32 %v868
  %vm875 = vmor %vm873, %vm874
  %v876 = vsel %vm875, %v868, %v872
  %v877 = vand.u32 2147483647, %v867
  %vm878 = vcmp.eq.f32.partialorder %v877, 8.507059e+37
  %v879 = vand.u32 %v867, 2147483648
  %v880 = vor.u32 1.1754944e-38, %v879
  %v881 = vsel %vm878, %v880, %v876
  %v882 = vmul.f32 1.0, %v881
  %v883 = vtanh.pop %v862
  %v884 = vmul.f32 %v882, %v765
  %886 = vrot.lane.b32.xlu0 %v883, 64
  %v887 = vpop.permute.xlu0 %886
  %v889 = vmul.f32 %v882, %v887
  %891 = vrot.lane.b32.xlu0 %v889, 32
  %v892 = vpop.permute.xlu0 %891
  %v894 = vadd.f32 %v884, %v892
  %v895 = vtanh.pop %v894
  %897 = vrot.lane.b32.xlu0 %v895, 64
  %v898 = vpop.permute.xlu0 %897
  %v900 = vmul.f32 %v882, %v898
  %v901 = vsel %vm125, %v834, 0
  %903 = vmatpush.msra.mxu0 0.0
  %904 = vmatpush.msra.mxu0 0.0
  %905 = vmatpush.msra.mxu0 0.0
  %906 = vmatpush.msra.mxu0 0.0
  %907 = vmatpush.msra.mxu0 0.0
  %908 = vmatpush.msra.mxu0 0.0
  %909 = vmatpush.msra.mxu0 0.0
  %910 = vmatpush.msra.mxu0 0.0
  %911 = vmatpush.msra.mxu0 0.0
  %912 = vmatpush.msra.mxu0 0.0
  %913 = vmatpush.msra.mxu0 0.0
  %914 = vmatpush.msra.mxu0 0.0
  %915 = vmatpush.msra.mxu0 %v32
  %916 = vmatpush.msra.mxu0 %v31
  %917 = vmatpush.msra.mxu0 %v30
  %918 = vmatpush.msra.mxu0 %v29
  %919 = vmatmul.f32.gmra.mxu0 %v901
  %v920 = vpop.f32.mrf.mxu0
  %v921 = vadd.f32 0.0, %v920
  %922 = vdwg.mxu0
  %v923 = vadd.f32 %v120, %v921
  %v924 = vxor.u32 %v923, 2147483648
  %v925 = vmul.f32 %v924, 1.442695
  %v926 = vpow.pop %v925
  %v927 = vadd.f32 %v926, 1.0
  %v928 = vrcp.pop %v927
  %v929 = vmul.f32 %v927, %v928
  %v930 = vsub.f32 1.0, %v929
  %v931 = vmul.f32 %v928, %v930
  %v932 = vadd.f32 %v928, %v931
  %vm933 = vweird.f32 %v927
  %vm934 = vweird.f32 %v928
  %vm935 = vmor %vm933, %vm934
  %v936 = vsel %vm935, %v928, %v932
  %v937 = vand.u32 2147483647, %v927
  %vm938 = vcmp.eq.f32.partialorder %v937, 8.507059e+37
  %v939 = vand.u32 %v927, 2147483648
  %v940 = vor.u32 1.1754944e-38, %v939
  %v941 = vsel %vm938, %v940, %v936
  %v942 = vmul.f32 1.0, %v941
  %v943 = vtanh.pop %v923
  %v944 = vmul.f32 %v942, %v825
  %946 = vrot.lane.b32.xlu0 %v943, 64
  %v947 = vpop.permute.xlu0 %946
  %v949 = vmul.f32 %v942, %v947
  %951 = vrot.lane.b32.xlu0 %v949, 32
  %v952 = vpop.permute.xlu0 %951
  %v954 = vadd.f32 %v944, %v952
  %v955 = vtanh.pop %v954
  %957 = vrot.lane.b32.xlu0 %v955, 64
  %v958 = vpop.permute.xlu0 %957
  %v960 = vmul.f32 %v942, %v958
  %962 = vrot.lane.b32.xlu0 %v960, 32
  %v963 = vpop.permute.xlu0 %962
  %966 = vrot.lane.b32.xlu0 %v900, 64
  %v967 = vpop.permute.xlu0 %966
  %v969 = vsel %vm125, %v963, %v967
  %v971 = vsel %vm195, %v969, 0
  %973 = vmatpush.msra.mxu0 0.0
  %974 = vmatpush.msra.mxu0 0.0
  %975 = vmatpush.msra.mxu0 0.0
  %976 = vmatpush.msra.mxu0 0.0
  %977 = vmatpush.msra.mxu0 0.0
  %978 = vmatpush.msra.mxu0 0.0
  %979 = vmatpush.msra.mxu0 0.0
  %980 = vmatpush.msra.mxu0 0.0
  %981 = vmatpush.msra.mxu0 %v40
  %982 = vmatpush.msra.mxu0 %v39
  %983 = vmatpush.msra.mxu0 %v38
  %984 = vmatpush.msra.mxu0 %v37
  %985 = vmatpush.msra.mxu0 %v36
  %986 = vmatpush.msra.mxu0 %v35
  %987 = vmatpush.msra.mxu0 %v34
  %988 = vmatpush.msra.mxu0 %v33
  %989 = vmatmul.f32.gmra.mxu0 %v971
  %v990 = vpop.f32.mrf.mxu0
  %v991 = vadd.f32 %v193, %v990
  %992 = vdwg.mxu0
  %v993 = vxor.u32 %v991, 2147483648
  %v994 = vmul.f32 %v993, 1.442695
  %v995 = vpow.pop %v994
  %v996 = vadd.f32 %v995, 1.0
  %v997 = vrcp.pop %v996
  %v998 = vmul.f32 %v996, %v997
  %v999 = vsub.f32 1.0, %v998
  %v1000 = vmul.f32 %v997, %v999
  %v1001 = vadd.f32 %v997, %v1000
  %vm1002 = vweird.f32 %v996
  %vm1003 = vweird.f32 %v997
  %vm1004 = vmor %vm1002, %vm1003
  %v1005 = vsel %vm1004, %v997, %v1001
  %v1006 = vand.u32 2147483647, %v996
  %vm1007 = vcmp.eq.f32.partialorder %v1006, 8.507059e+37
  %v1008 = vand.u32 %v996, 2147483648
  %v1009 = vor.u32 1.1754944e-38, %v1008
  %v1010 = vsel %vm1007, %v1009, %v1005
  %v1011 = vmul.f32 1.0, %v1010
  %v1012 = vtanh.pop %v991
  %v1013 = vmul.f32 %v1011, %v894
  %1015 = vrot.lane.b32.xlu0 %v1012, 64
  %v1016 = vpop.permute.xlu0 %1015
  %v1018 = vmul.f32 %v1011, %v1016
  %1020 = vrot.lane.b32.xlu0 %v1018, 32
  %v1021 = vpop.permute.xlu0 %1020
  %v1023 = vadd.f32 %v1013, %v1021
  %v1024 = vtanh.pop %v1023
  %1026 = vrot.lane.b32.xlu0 %v1024, 64
  %v1027 = vpop.permute.xlu0 %1026
  %v1029 = vmul.f32 %v1011, %v1027
  %v1030 = vsel %vm125, %v963, 0
  %1032 = vmatpush.msra.mxu0 0.0
  %1033 = vmatpush.msra.mxu0 0.0
  %1034 = vmatpush.msra.mxu0 0.0
  %1035 = vmatpush.msra.mxu0 0.0
  %1036 = vmatpush.msra.mxu0 0.0
  %1037 = vmatpush.msra.mxu0 0.0
  %1038 = vmatpush.msra.mxu0 0.0
  %1039 = vmatpush.msra.mxu0 0.0
  %1040 = vmatpush.msra.mxu0 0.0
  %1041 = vmatpush.msra.mxu0 0.0
  %1042 = vmatpush.msra.mxu0 0.0
  %1043 = vmatpush.msra.mxu0 0.0
  %1044 = vmatpush.msra.mxu0 %v32
  %1045 = vmatpush.msra.mxu0 %v31
  %1046 = vmatpush.msra.mxu0 %v30
  %1047 = vmatpush.msra.mxu0 %v29
  %1048 = vmatmul.f32.gmra.mxu0 %v1030
  %v1049 = vpop.f32.mrf.mxu0
  %v1050 = vadd.f32 0.0, %v1049
  %1051 = vdwg.mxu0
  %v1052 = vadd.f32 %v123, %v1050
  %v1053 = vxor.u32 %v1052, 2147483648
  %v1054 = vmul.f32 %v1053, 1.442695
  %v1055 = vpow.pop %v1054
  %v1056 = vadd.f32 %v1055, 1.0
  %v1057 = vrcp.pop %v1056
  %v1058 = vmul.f32 %v1056, %v1057
  %v1059 = vsub.f32 1.0, %v1058
  %v1060 = vmul.f32 %v1057, %v1059
  %v1061 = vadd.f32 %v1057, %v1060
  %vm1062 = vweird.f32 %v1056
  %vm1063 = vweird.f32 %v1057
  %vm1064 = vmor %vm1062, %vm1063
  %v1065 = vsel %vm1064, %v1057, %v1061
  %v1066 = vand.u32 2147483647, %v1056
  %vm1067 = vcmp.eq.f32.partialorder %v1066, 8.507059e+37
  %v1068 = vand.u32 %v1056, 2147483648
  %v1069 = vor.u32 1.1754944e-38, %v1068
  %v1070 = vsel %vm1067, %v1069, %v1065
  %v1071 = vmul.f32 1.0, %v1070
  %v1072 = vtanh.pop %v1052
  %v1073 = vmul.f32 %v1071, %v954
  %1075 = vrot.lane.b32.xlu0 %v1072, 64
  %v1076 = vpop.permute.xlu0 %1075
  %v1078 = vmul.f32 %v1071, %v1076
  %1080 = vrot.lane.b32.xlu0 %v1078, 32
  %v1081 = vpop.permute.xlu0 %1080
  %v1083 = vadd.f32 %v1073, %v1081
  %v1084 = vtanh.pop %v1083
  %1086 = vrot.lane.b32.xlu0 %v1084, 64
  %v1087 = vpop.permute.xlu0 %1086
  %v1089 = vmul.f32 %v1071, %v1087
  %1091 = vrot.lane.b32.xlu0 %v1089, 32
  %v1092 = vpop.permute.xlu0 %1091
  %1095 = vrot.lane.b32.xlu0 %v1029, 64
  %v1096 = vpop.permute.xlu0 %1095
  %v1098 = vsel %vm125, %v1092, %v1096
  %v1100 = vsel %vm195, %v1098, 0
  %1102 = vmatpush.msra.mxu0 0.0
  %1103 = vmatpush.msra.mxu0 0.0
  %1104 = vmatpush.msra.mxu0 0.0
  %1105 = vmatpush.msra.mxu0 0.0
  %1106 = vmatpush.msra.mxu0 0.0
  %1107 = vmatpush.msra.mxu0 0.0
  %1108 = vmatpush.msra.mxu0 0.0
  %1109 = vmatpush.msra.mxu0 0.0
  %1110 = vmatpush.msra.mxu0 %v40
  %1111 = vmatpush.msra.mxu0 %v39
  %1112 = vmatpush.msra.mxu0 %v38
  %1113 = vmatpush.msra.mxu0 %v37
  %1114 = vmatpush.msra.mxu0 %v36
  %1115 = vmatpush.msra.mxu0 %v35
  %1116 = vmatpush.msra.mxu0 %v34
  %1117 = vmatpush.msra.mxu0 %v33
  %1118 = vmatmul.f32.gmra.mxu0 %v1100
  %v1119 = vpop.f32.mrf.mxu0
  %v1120 = vadd.f32 %v193, %v1119
  %1121 = vdwg.mxu0
  %v1122 = vxor.u32 %v1120, 2147483648
  %v1123 = vmul.f32 %v1122, 1.442695
  %v1124 = vpow.pop %v1123
  %v1125 = vadd.f32 %v1124, 1.0
  %v1126 = vrcp.pop %v1125
  %v1127 = vmul.f32 %v1125, %v1126
  %v1128 = vsub.f32 1.0, %v1127
  %v1129 = vmul.f32 %v1126, %v1128
  %v1130 = vadd.f32 %v1126, %v1129
  %vm1131 = vweird.f32 %v1125
  %vm1132 = vweird.f32 %v1126
  %vm1133 = vmor %vm1131, %vm1132
  %v1134 = vsel %vm1133, %v1126, %v1130
  %v1135 = vand.u32 2147483647, %v1125
  %vm1136 = vcmp.eq.f32.partialorder %v1135, 8.507059e+37
  %v1137 = vand.u32 %v1125, 2147483648
  %v1138 = vor.u32 1.1754944e-38, %v1137
  %v1139 = vsel %vm1136, %v1138, %v1134
  %v1140 = vmul.f32 1.0, %v1139
  %v1141 = vtanh.pop %v1120
  %v1142 = vmul.f32 %v1140, %v1023
  %1144 = vrot.lane.b32.xlu0 %v1141, 64
  %v1145 = vpop.permute.xlu0 %1144
  %v1147 = vmul.f32 %v1140, %v1145
  %1149 = vrot.lane.b32.xlu0 %v1147, 32
  %v1150 = vpop.permute.xlu0 %1149
  %v1152 = vadd.f32 %v1142, %v1150
  %v1153 = vtanh.pop %v1152
  %1155 = vrot.lane.b32.xlu0 %v1153, 64
  %v1156 = vpop.permute.xlu0 %1155
  %v1158 = vmul.f32 %v1140, %v1156
  %v1159 = vld [vmem:[%s6] sm:$0xff]
  %v1160 = vld [vmem:[%s6 + $0x8] sm:$0xff]
  %v1161 = vld [vmem:[%s6 + $0x10] sm:$0xff]
  %v1162 = vld [vmem:[%s6 + $0x18] sm:$0xff]
  %v1163 = vld [vmem:[%s7] sm:$0x1]
  %v1165 = vperm.slane %v1163, 0
  %1168 = vrot.lane.b32.xlu0 %v1158, 32
  %v1169 = vpop.permute.xlu0 %1168
  %v1170 = vsel %vm125, %v1169, 0
  %1172 = vmatpush.msra.mxu0 0.0
  %1173 = vmatpush.msra.mxu0 0.0
  %1174 = vmatpush.msra.mxu0 0.0
  %1175 = vmatpush.msra.mxu0 0.0
  %1176 = vmatpush.msra.mxu0 0.0
  %1177 = vmatpush.msra.mxu0 0.0
  %1178 = vmatpush.msra.mxu0 0.0
  %1179 = vmatpush.msra.mxu0 0.0
  %1180 = vmatpush.msra.mxu0 0.0
  %1181 = vmatpush.msra.mxu0 0.0
  %1182 = vmatpush.msra.mxu0 0.0
  %1183 = vmatpush.msra.mxu0 0.0
  %1184 = vmatpush.msra.mxu0 %v1162
  %1185 = vmatpush.msra.mxu0 %v1161
  %1186 = vmatpush.msra.mxu0 %v1160
  %1187 = vmatpush.msra.mxu0 %v1159
  %1188 = vmatmul.f32.gmra.mxu0 %v1170
  %v1189 = vpop.f32.mrf.mxu0
  %v1190 = vadd.f32 %v1165, %v1189
  %1191 = vdwg.mxu0
  %v1192 = vmax.f32 %v1190, 0.0
  %1193 = vst [vmem:[%s8] sm:$0xff] %v1192
  // Predicated region
  $region34: #{air_model_forward.1} parent=0 // pred_check
    _
  $region35: #{air_model_forward.1} parent=0 // pred_check_branch
    %1195 = sbr.rel (0) target = $region37
  $region36: #{air_model_forward.1} parent=0 // pred_region
    _
  $region37: #{air_model_forward.1} parent=0 // pred_fallthru
    _
  // Predicated region
  $region38: #{air_model_forward.1} parent=0 // pred_check
    _
  $region39: #{air_model_forward.1} parent=0 // pred_check_branch
    %1197 = sbr.rel (0) target = $region41
  $region40: #{air_model_forward.1} parent=0 // pred_region
    _
  $region41: #{air_model_forward.1} parent=0 // pred_fallthru
    _

</llo_original>
